<compile_context>
chip_gen: v6e
topology: v6e:2x2x1
jax: 0.10.0
libtpu: 0.0.40
codegen_flags: <defaults>
</compile_context>

<pallas_src>
import functools

import jax
import jax.numpy as jnp
from jax.experimental import pallas as pl
from jax.experimental.pallas import tpu as pltpu

EPS = 1e-5
_LANE_TILE = 8192            # target lane-tile per grid step for 1x1 / eltwise passes


def _pick_tile(length, target=_LANE_TILE):
    """Largest multiple-of-128 tile <= target dividing `length`
    (falls back to the full axis, which is always a legal block)."""
    if length <= target:
        return length
    for t in range(target, 127, -128):
        if length % t == 0:
            return t
    return length


@functools.lru_cache(maxsize=None)
def _vmem_limit_bytes():
    # ~half of physical VMEM per chip (64 MiB on v5e/v6e, 32 MiB on v7x);
    # conservative 32 MiB if the query is unavailable.
    limit = 32 * 1024 * 1024
    try:
        cap = int(pltpu.get_tpu_info().vmem_capacity_bytes)
        limit = max(limit, min(cap // 2, 96 * 1024 * 1024))
    except Exception:
        pass
    return limit


def _compiler_params(n_grid_axes):
    return pltpu.CompilerParams(
        dimension_semantics=("parallel",) * n_grid_axes,
        vmem_limit_bytes=_vmem_limit_bytes(),
    )


# ---------------------------------------------------------------------------
# Roll-convention probe (run once, outside jit)
# ---------------------------------------------------------------------------
def probe_roll_semantics():
    """Returns +1 if pltpu.roll matches jnp.roll, -1 if the shift direction is
    reversed, None if roll is unusable (3x3 kernel then uses slice+concat)."""
    def kernel(x_ref, o_ref):
        o_ref[...] = pltpu.roll(x_ref[...], 1, 1)

    try:
        x = jnp.tile(jnp.arange(128, dtype=jnp.float32)[None, :], (8, 1))
        out = jax.block_until_ready(
            pl.pallas_call(
                kernel, out_shape=jax.ShapeDtypeStruct((8, 128), jnp.float32))(x))
        v = float(out[0, 0])
        if v == 127.0:        # out[0] = in[-1]  -> jnp.roll convention
            return 1
        if v == 1.0:          # out[0] = in[+1]  -> reversed convention
            return -1
    except Exception:
        pass
    return None


# ---------------------------------------------------------------------------
# Kernel 1: 1x1 conv (+ optional per-output-channel bias) + packed BN partials
# ---------------------------------------------------------------------------
def _make_conv1x1_kernel(with_bias):
    def kernel(*refs):
        if with_bias:
            x_ref, w_ref, b_ref, y_ref, st_ref = refs
        else:
            x_ref, w_ref, y_ref, st_ref = refs
        y = jnp.dot(w_ref[...], x_ref[...], preferred_element_type=jnp.float32)
        if with_bias:
            y = y + b_ref[...]                      # folded BN shift of the previous stage
        y_ref[...] = y.astype(y_ref.dtype)
        s = jnp.sum(y, axis=1, keepdims=True)
        ss = jnp.sum(y * y, axis=1, keepdims=True)
        st_ref[0] = jnp.concatenate([s, ss], axis=1)   # packed (Cout, 2) moments
    return kernel


def conv1x1_stats(x, w, bias=None):
    """y = w @ x (+ bias); also returns per-tile packed (sum, sumsq) moments."""
    cin, length = x.shape
    cout = w.shape[0]
    tl = _pick_tile(length)
    t = length // tl

    inputs = [x, w]
    in_specs = [pl.BlockSpec((cin, tl), lambda j: (0, j)),
                pl.BlockSpec((cout, cin), lambda j: (0, 0))]
    if bias is not None:
        inputs.append(bias)
        in_specs.append(pl.BlockSpec((cout, 1), lambda j: (0, 0)))

    return pl.pallas_call(
        _make_conv1x1_kernel(bias is not None),
        grid=(t,),
        in_specs=in_specs,
        out_specs=[pl.BlockSpec((cout, tl), lambda j: (0, j)),
                   pl.BlockSpec((1, cout, 2), lambda j: (j, 0, 0))],
        out_shape=[jax.ShapeDtypeStruct((cout, length), jnp.bfloat16),
                   jax.ShapeDtypeStruct((t, cout, 2), jnp.float32)],
        compiler_params=_compiler_params(1),
    )(*inputs)


# ---------------------------------------------------------------------------
# Kernel 2: 3x3 conv as ONE fused matmul (BN1 folded into the augmented weight)
# ---------------------------------------------------------------------------
def _make_conv3x3_kernel(height, width, roll_sign):
    hw = height * width
    deltas = [(kh - 1) * width + (kw - 1) for kh in range(3) for kw in range(3)]

    def shift(z, delta):
        # out[:, m] = z[:, (m + delta) % hw]; wrapped / out-of-image positions
        # are zeroed by the tap masks.
        if delta % hw == 0:
            return z
        if roll_sign is None:                         # fallback: static slices + concat
            d = delta % hw
            return jnp.concatenate([z[:, d:], z[:, :d]], axis=1)
        amt = (-delta if roll_sign == 1 else delta) % hw
        return pltpu.roll(z, amt, axis=1)             # XLU rotation (near-free slot)

    def kernel(y1_ref, w_ref, m_ref, y2_ref, st_ref):
        z = y1_ref[...]                               # (C1, HW) bf16
        m = m_ref[...]                                # (9, HW)  bf16 0/1 padding masks
        rows = [shift(z, d) * m[k:k + 1, :] for k, d in enumerate(deltas)]
        rows.append(m)                                # bias rows (pair with w2 @ BN1-shift)
        op = jnp.concatenate(rows, axis=0)            # (9*C1 + 9, HW) bf16
        acc = jnp.dot(w_ref[...], op, preferred_element_type=jnp.float32)
        y2_ref[...] = acc.astype(y2_ref.dtype)
        s = jnp.sum(acc, axis=1, keepdims=True)
        ss = jnp.sum(acc * acc, axis=1, keepdims=True)
        st_ref[0] = jnp.concatenate([s, ss], axis=1)  # per-image packed moments
    return kernel


def conv3x3_stats(y1, w2aug, masks, *, n_img, height, width, roll_sign):
    c1 = y1.shape[0]
    c2, kdim = w2aug.shape
    hw = height * width
    return pl.pallas_call(
        _make_conv3x3_kernel(height, width, roll_sign),
        grid=(n_img,),
        in_specs=[pl.BlockSpec((c1, hw), lambda i: (0, i)),
                  pl.BlockSpec((c2, kdim), lambda i: (0, 0)),
                  pl.BlockSpec((9, hw), lambda i: (0, 0))],
        out_specs=[pl.BlockSpec((c2, hw), lambda i: (0, i)),
                   pl.BlockSpec((1, c2, 2), lambda i: (i, 0, 0))],
        out_shape=[jax.ShapeDtypeStruct((c2, n_img * hw), jnp.bfloat16),
                   jax.ShapeDtypeStruct((n_img, c2, 2), jnp.float32)],
        compiler_params=_compiler_params(1),
    )(y1, w2aug, masks)


# ---------------------------------------------------------------------------
# Kernel 3: fused BN3-apply + ReLU + BN_s-apply(skip) + residual add
# ---------------------------------------------------------------------------
def _bn_relu_add_kernel(y3_ref, sk_ref, a3_ref, b3_ref, as_ref, bs_ref, o_ref):
    main = jnp.maximum(y3_ref[...].astype(jnp.float32) * a3_ref[...] + b3_ref[...], 0.0)
    sk = sk_ref[...].astype(jnp.float32) * as_ref[...] + bs_ref[...]
    o_ref[...] = (main + sk).astype(o_ref.dtype)


def bn_relu_add(y3, skip, a3, b3, a_s, b_s):
    c3, length = y3.shape
    tl = _pick_tile(length)
    t = length // tl
    vec = pl.BlockSpec((c3, 1), lambda j: (0, 0))
    return pl.pallas_call(
        _bn_relu_add_kernel,
        grid=(t,),
        in_specs=[pl.BlockSpec((c3, tl), lambda j: (0, j)),
                  pl.BlockSpec((c3, tl), lambda j: (0, j)),
                  vec, vec, vec, vec],
        out_specs=pl.BlockSpec((c3, tl), lambda j: (0, j)),
        # Module output stays f32 (PyTorch contract); a bf16 variant would halve
        # the dominant HBM write if a downstream consumer accepts bf16.
        out_shape=jax.ShapeDtypeStruct((c3, length), jnp.float32),
        compiler_params=_compiler_params(1),
    )(y3, skip, a3, b3, a_s, b_s)


# ---------------------------------------------------------------------------
# Host-side glue: BN-moment finalization, tap masks, strided subsampling
# ---------------------------------------------------------------------------
def _moments_to_affine(s, ss, count, gamma, beta):
    mean = s / count
    var = jnp.maximum(ss / count - mean * mean, 0.0)      # biased var (training-mode BN)
    scale = gamma.astype(jnp.float32) * jax.lax.rsqrt(var + EPS)
    shift = beta.astype(jnp.float32) - mean * scale
    return scale, shift                                   # (C,), (C,)


def _finalize_bn(stats, count, gamma, beta):
    tot = jnp.sum(stats, axis=0)                          # (C, 2)
    return _moments_to_affine(tot[:, 0], tot[:, 1], count, gamma, beta)


def _make_tap_masks(height, width):
    h = jnp.arange(height)[:, None]
    w = jnp.arange(width)[None, :]
    ms = []
    for kh in range(3):
        for kw in range(3):
            valid = ((h + kh - 1 >= 0) & (h + kh - 1 < height) &
                     (w + kw - 1 >= 0) & (w + kw - 1 < width))
            ms.append(valid.reshape(height * width))
    return jnp.stack(ms, axis=0).astype(jnp.bfloat16)     # (9, HW)


def _subsample(x_cl, n, height, width, stride):
    """Channel-major (C, N*H*W) -> (C, N*Ho*Wo) spatial stride (XLA strided slice)."""
    if stride == 1:
        return x_cl
    c = x_cl.shape[0]
    ho = (height - 1) // stride + 1
    wo = (width - 1) // stride + 1
    return (x_cl.reshape(c, n, height, width)[:, :, ::stride, ::stride]
            .reshape(c, n * ho * wo))


# ---------------------------------------------------------------------------
# Parameter init (shapes match nn.Conv2d / nn.BatchNorm2d)
# ---------------------------------------------------------------------------
def init_params(key, in_channels, c1, c2, c3, first_iter):
    ks = jax.random.split(key, 12)
    p = {
        "w1": jax.random.normal(ks[0], (c1, in_channels, 1, 1), jnp.float32) * 0.1,
        "g1": 1.0 + 0.1 * jax.random.normal(ks[1], (c1,), jnp.float32),
        "b1": 0.1 * jax.random.normal(ks[2], (c1,), jnp.float32),
        "w2": jax.random.normal(ks[3], (c2, c1, 3, 3), jnp.float32) * 0.1,
        "g2": 1.0 + 0.1 * jax.random.normal(ks[4], (c2,), jnp.float32),
        "b2": 0.1 * jax.random.normal(ks[5], (c2,), jnp.float32),
        "w3": jax.random.normal(ks[6], (c3, c2, 1, 1), jnp.float32) * 0.1,
        "g3": 1.0 + 0.1 * jax.random.normal(ks[7], (c3,), jnp.float32),
        "b3": 0.1 * jax.random.normal(ks[8], (c3,), jnp.float32),
    }
    if first_iter:
        p["ws"] = jax.random.normal(ks[9], (c3, in_channels, 1, 1), jnp.float32) * 0.1
        p["gs"] = 1.0 + 0.1 * jax.random.normal(ks[10], (c3,), jnp.float32)
        p["bs"] = 0.1 * jax.random.normal(ks[11], (c3,), jnp.float32)
    return p


# ---------------------------------------------------------------------------
# Forward pass (mirrors conv_residual_bottleneck.forward, training-mode BN)
# ---------------------------------------------------------------------------
def conv_residual_bottleneck_forward(x_nchw, params, *, reduce, first_iter,
                                     roll_sign=None):
    stride = 2 if reduce else 1
    n, cin, height, width = x_nchw.shape
    ho = (height + 2 - 3) // stride + 1
    wo = (width + 2 - 3) // stride + 1
    hw, hwo = height * width, ho * wo
    length, length_o = n * hw, n * hwo

    c1 = params["w1"].shape[0]
    c2 = params["w2"].shape[0]
    c3 = params["w3"].shape[0]

    if not first_iter and (stride != 1 or cin != c3):
        raise ValueError(
            "identity skip requires reduce=False and in_channels == inner_channel_3 "
            f"(got stride={stride}, in_channels={cin}, inner_channel_3={c3})")

    # Channel-major folded layout: (C, N*H*W), huge axis on lanes.
    x_cl = jnp.transpose(x_nchw, (1, 0, 2, 3)).reshape(cin, length).astype(jnp.bfloat16)

    # ---- stage 1: 1x1 conv (no input affine) + BN1 moments -------------------
    w1 = params["w1"][:, :, 0, 0].astype(jnp.bfloat16)
    y1, st1 = conv1x1_stats(x_cl, w1)
    sc1, sh1 = _finalize_bn(st1, length, params["g1"], params["b1"])

    # ---- stage 2: 3x3 conv with BN1 folded into the augmented weight ---------
    w2 = params["w2"]                                              # (C2, C1, 3, 3)
    w2_scaled = jnp.transpose(w2 * sc1[None, :, None, None],
                              (0, 2, 3, 1)).reshape(c2, 9 * c1)
    w2_bias = jnp.einsum("oihw,i->ohw", w2, sh1).reshape(c2, 9)
    w2aug = jnp.concatenate([w2_scaled, w2_bias], axis=1).astype(jnp.bfloat16)
    masks = _make_tap_masks(height, width)
    y2_full, st2 = conv3x3_stats(y1, w2aug, masks, n_img=n, height=height,
                                 width=width, roll_sign=roll_sign)

    if stride == 2:
        # TODO(synk): in-kernel strided writeback would avoid this full-res y2
        # HBM round trip; BlockSpec can't express a 2-D intra-block strided gather.
        y2 = _subsample(y2_full, n, height, width, stride)
        y2f = y2.astype(jnp.float32)
        sc2, sh2 = _moments_to_affine(jnp.sum(y2f, axis=1),
                                      jnp.sum(y2f * y2f, axis=1),
                                      length_o, params["g2"], params["b2"])
    else:
        y2 = y2_full
        sc2, sh2 = _finalize_bn(st2, length, params["g2"], params["b2"])

    # ---- stage 3: 1x1 conv with BN2 folded into weights + bias ----------------
    w3 = params["w3"][:, :, 0, 0]
    w3f = (w3 * sc2[None, :]).astype(jnp.bfloat16)
    bias3 = (w3 @ sh2)[:, None].astype(jnp.float32)
    y3, st3 = conv1x1_stats(y2, w3f, bias3)
    sc3, sh3 = _finalize_bn(st3, length_o, params["g3"], params["b3"])

    # ---- skip path ------------------------------------------------------------
    if first_iter:
        xs = _subsample(x_cl, n, height, width, stride)   # 1x1 stride-s conv == conv on strided input
        ws = params["ws"][:, :, 0, 0].astype(jnp.bfloat16)
        yskip, sts = conv1x1_stats(xs, ws)
        sc_s, sh_s = _finalize_bn(sts, length_o, params["gs"], params["bs"])
    else:
        yskip = x_cl
        sc_s = jnp.ones((cin,), jnp.float32)
        sh_s = jnp.zeros((cin,), jnp.float32)

    # ---- stage 4: fused BN3 + ReLU + BN_s(skip) + residual add ----------------
    out_cl = bn_relu_add(y3, yskip, sc3[:, None], sh3[:, None],
                         sc_s[:, None], sh_s[:, None])
    return jnp.transpose(out_cl.reshape(c3, n, ho, wo), (1, 0, 2, 3))   # NCHW f32


# ---------------------------------------------------------------------------
# Pure-JAX f32 reference (loose numerical sanity check)
# ---------------------------------------------------------------------------
def _reference_forward(x, params, reduce, first_iter):
    stride = 2 if reduce else 1

    def conv(inp, w, s, pad):
        return jax.lax.conv_general_dilated(
            inp, w, window_strides=(s, s), padding=((pad, pad), (pad, pad)),
            dimension_numbers=("NCHW", "OIHW", "NCHW"))

    def bn(inp, gamma, beta):
        mean = inp.mean(axis=(0, 2, 3), keepdims=True)
        var = inp.var(axis=(0, 2, 3), keepdims=True)
        y = (inp - mean) * jax.lax.rsqrt(var + EPS)
        return y * gamma.reshape(1, -1, 1, 1) + beta.reshape(1, -1, 1, 1)

    y = bn(conv(x, params["w1"], 1, 0), params["g1"], params["b1"])
    y = bn(conv(y, params["w2"], stride, 1), params["g2"], params["b2"])
    y = bn(conv(y, params["w3"], 1, 0), params["g3"], params["b3"])
    y = jnp.maximum(y, 0.0)
    if first_iter:
        skip = bn(conv(x, params["ws"], stride, 0), params["gs"], params["bs"])
    else:
        skip = x
    return y + skip


# ---------------------------------------------------------------------------
if __name__ == "__main__":
    in_channels, c1, c2, c3 = 8, 8, 8, 16
    reduce_flag, first_iter = True, True

    key = jax.random.PRNGKey(0)
    kx, kp = jax.random.split(key)
    x = jax.random.normal(kx, (2, in_channels, 16, 16), jnp.float32)   # NCHW input
    params = init_params(kp, in_channels, c1, c2, c3, first_iter)

    roll_sign = probe_roll_semantics()   # +1 / -1 / None (concat fallback)

    fwd = jax.jit(functools.partial(conv_residual_bottleneck_forward,
                                    reduce=reduce_flag, first_iter=first_iter,
                                    roll_sign=roll_sign))
    out = jax.block_until_ready(fwd(x, params))

    assert out.shape == (2, c3, 8, 8), out.shape
    assert bool(jnp.all(jnp.isfinite(out)))

    # Loose check vs. pure-JAX f32 reference (kernels stream activations in bf16,
    # and train-mode BN stats come from the f32 accumulators).
    ref = _reference_forward(x, params, reduce_flag, first_iter)
    err = float(jnp.max(jnp.abs(out - ref)))
    scale = float(jnp.max(jnp.abs(ref))) + 1.0
    assert err < 0.1 * scale, (err, scale)

    print("KERNEL_OK")
</pallas_src>

<mosaic_0001>
module attributes {stable_mosaic.version = 11 : i64} {
  func.func @kernel(%arg0: memref<8x128xf32, #tpu.memory_space<vmem>>, %arg1: memref<8x128xf32, #tpu.memory_space<vmem>>) attributes {dimension_semantics = [], scalar_prefetch = 0 : i64, scratch_operands = 0 : i64, tpu.core_type = #tpu.core_type<tc>} {
    %c0 = arith.constant 0 : index
    %c0_0 = arith.constant 0 : index
    %0 = vector.load %arg0[%c0, %c0_0] : memref<8x128xf32, #tpu.memory_space<vmem>>, vector<8x128xf32>
    %c1_i32 = arith.constant 1 : i32
    %1 = tpu.dynamic_rotate %0 by %c1_i32 dim 1 : vector<8x128xf32>, i32 -> vector<8x128xf32>
    %c0_1 = arith.constant 0 : index
    %c0_2 = arith.constant 0 : index
    %2 = vector.load %arg1[%c0_1, %c0_2] : memref<8x128xf32, #tpu.memory_space<vmem>>, vector<8x128xf32>
    tpu.vector_store %arg1[%c0_1, %c0_2], %1 {strides = array<i32>} : memref<8x128xf32, #tpu.memory_space<vmem>>, vector<8x128xf32>,
    return
  }
}

module attributes {stable_mosaic.version = 11 : i64} {
  func.func @kernel(%arg0: i32, %arg1: memref<8x512xbf16, #tpu.memory_space<vmem>>, %arg2: memref<8x8xbf16, #tpu.memory_space<vmem>>, %arg3: memref<8x512xbf16, #tpu.memory_space<vmem>>, %arg4: memref<1x8x2xf32, #tpu.memory_space<vmem>>) attributes {dimension_semantics = [#tpu.dimension_semantics<parallel>], iteration_bounds = array<i64: 1>, scalar_prefetch = 0 : i64, scratch_operands = 0 : i64, tpu.core_type = #tpu.core_type<tc>, window_params = [{transform_indices = @transform_0, window_bounds = array<i64: 8, 512>}, {pipeline_mode = #tpu.pipeline_mode<synchronous>, transform_indices = @transform_1, window_bounds = array<i64: 8, 8>}, {transform_indices = @transform_2, window_bounds = array<i64: 8, 512>}, {transform_indices = @transform_3, window_bounds = array<i64: 1, 8, 2>}]} {
    %c0 = arith.constant 0 : index
    %c0_0 = arith.constant 0 : index
    %0 = vector.load %arg2[%c0, %c0_0] : memref<8x8xbf16, #tpu.memory_space<vmem>>, vector<8x8xbf16>
    %c0_1 = arith.constant 0 : index
    %c0_2 = arith.constant 0 : index
    %1 = vector.load %arg1[%c0_1, %c0_2] : memref<8x512xbf16, #tpu.memory_space<vmem>>, vector<8x512xbf16>
    %cst = arith.constant dense<0.000000e+00> : vector<8x512xf32>
    %2 = tpu.matmul %0, %1, %cst {dimension_numbers = #tpu.dot_dimension_numbers<[1], [0], [0], [1], [0, 0, 1, 1], [], []>} : vector<8x8xbf16>, vector<8x512xbf16>, vector<8x512xf32> -> vector<8x512xf32>
    %3 = arith.truncf %2 : vector<8x512xf32> to vector<8x512xbf16>
    %c0_3 = arith.constant 0 : index
    %c0_4 = arith.constant 0 : index
    %4 = vector.load %arg3[%c0_3, %c0_4] : memref<8x512xbf16, #tpu.memory_space<vmem>>, vector<8x512xbf16>
    tpu.vector_store %arg3[%c0_3, %c0_4], %3 {strides = array<i32>} : memref<8x512xbf16, #tpu.memory_space<vmem>>, vector<8x512xbf16>,
    %cst_5 = arith.constant dense<0.000000e+00> : vector<8xf32>
    %5 = vector.multi_reduction <add>, %2, %cst_5 [1] : vector<8x512xf32> to vector<8xf32>
    %6 = vector.shape_cast %5 : vector<8xf32> to vector<8x1xf32>
    %7 = arith.mulf %2, %2 : vector<8x512xf32>
    %cst_6 = arith.constant dense<0.000000e+00> : vector<8xf32>
    %8 = vector.multi_reduction <add>, %7, %cst_6 [1] : vector<8x512xf32> to vector<8xf32>
    %9 = vector.shape_cast %8 : vector<8xf32> to vector<8x1xf32>
    %10 = tpu.concatenate %6, %9 in 1 : vector<8x1xf32>, vector<8x1xf32> -> vector<8x2xf32>
    %c0_7 = arith.constant 0 : index
    %c0_8 = arith.constant 0 : index
    %c0_9 = arith.constant 0 : index
    %11 = vector.load %arg4[%c0_7, %c0_8, %c0_9] : memref<1x8x2xf32, #tpu.memory_space<vmem>>, vector<1x8x2xf32>
    %12 = vector.shape_cast %11 : vector<1x8x2xf32> to vector<8x2xf32>
    %13 = vector.shape_cast %10 : vector<8x2xf32> to vector<1x8x2xf32>
    tpu.vector_store %arg4[%c0_7, %c0_8, %c0_9], %13 {strides = array<i32>} : memref<1x8x2xf32, #tpu.memory_space<vmem>>, vector<1x8x2xf32>,
    return
  }
  func.func @transform_0(%arg0: i32) -> (i32, i32) {
    %c0_i32 = arith.constant 0 : i32
    %c0_i32_0 = arith.constant 0 : i32
    return %c0_i32, %arg0 : i32, i32
  }
  func.func @transform_1(%arg0: i32) -> (i32, i32) {
    %c0_i32 = arith.constant 0 : i32
    %c0_i32_0 = arith.constant 0 : i32
    %c0_i32_1 = arith.constant 0 : i32
    return %c0_i32, %c0_i32_0 : i32, i32
  }
  func.func @transform_2(%arg0: i32) -> (i32, i32) {
    %c0_i32 = arith.constant 0 : i32
    %c0_i32_0 = arith.constant 0 : i32
    return %c0_i32, %arg0 : i32, i32
  }
  func.func @transform_3(%arg0: i32) -> (i32, i32, i32) {
    %c0_i32 = arith.constant 0 : i32
    %c0_i32_0 = arith.constant 0 : i32
    %c0_i32_1 = arith.constant 0 : i32
    return %arg0, %c0_i32, %c0_i32_0 : i32, i32, i32
  }
}

module attributes {stable_mosaic.version = 11 : i64} {
  func.func @kernel(%arg0: i32, %arg1: memref<8x256xbf16, #tpu.memory_space<vmem>>, %arg2: memref<8x81xbf16, #tpu.memory_space<vmem>>, %arg3: memref<9x256xbf16, #tpu.memory_space<vmem>>, %arg4: memref<8x256xbf16, #tpu.memory_space<vmem>>, %arg5: memref<1x8x2xf32, #tpu.memory_space<vmem>>) attributes {dimension_semantics = [#tpu.dimension_semantics<parallel>], iteration_bounds = array<i64: 2>, scalar_prefetch = 0 : i64, scratch_operands = 0 : i64, tpu.core_type = #tpu.core_type<tc>, window_params = [{transform_indices = @transform_0, window_bounds = array<i64: 8, 256>}, {pipeline_mode = #tpu.pipeline_mode<synchronous>, transform_indices = @transform_1, window_bounds = array<i64: 8, 81>}, {pipeline_mode = #tpu.pipeline_mode<synchronous>, transform_indices = @transform_2, window_bounds = array<i64: 9, 256>}, {transform_indices = @transform_3, window_bounds = array<i64: 8, 256>}, {transform_indices = @transform_4, window_bounds = array<i64: 1, 8, 2>}]} {
    %c0 = arith.constant 0 : index
    %c0_0 = arith.constant 0 : index
    %0 = vector.load %arg1[%c0, %c0_0] : memref<8x256xbf16, #tpu.memory_space<vmem>>, vector<8x256xbf16>
    %c0_1 = arith.constant 0 : index
    %c0_2 = arith.constant 0 : index
    %1 = vector.load %arg3[%c0_1, %c0_2] : memref<9x256xbf16, #tpu.memory_space<vmem>>, vector<9x256xbf16>
    %2 = vector.extract_strided_slice %0 {offsets = [0, 239], sizes = [8, 17], strides = [1, 1]} : vector<8x256xbf16> to vector<8x17xbf16>
    %3 = vector.extract_strided_slice %0 {offsets = [0, 0], sizes = [8, 239], strides = [1, 1]} : vector<8x256xbf16> to vector<8x239xbf16>
    %4 = tpu.concatenate %2, %3 in 1 : vector<8x17xbf16>, vector<8x239xbf16> -> vector<8x256xbf16>
    %5 = vector.extract_strided_slice %1 {offsets = [0, 0], sizes = [1, 256], strides = [1, 1]} : vector<9x256xbf16> to vector<1x256xbf16>
    %6 = vector.broadcast %5 : vector<1x256xbf16> to vector<8x256xbf16>
    %7 = arith.mulf %4, %6 : vector<8x256xbf16>
    %8 = vector.extract_strided_slice %0 {offsets = [0, 240], sizes = [8, 16], strides = [1, 1]} : vector<8x256xbf16> to vector<8x16xbf16>
    %9 = vector.extract_strided_slice %0 {offsets = [0, 0], sizes = [8, 240], strides = [1, 1]} : vector<8x256xbf16> to vector<8x240xbf16>
    %10 = tpu.concatenate %8, %9 in 1 : vector<8x16xbf16>, vector<8x240xbf16> -> vector<8x256xbf16>
    %11 = vector.extract_strided_slice %1 {offsets = [1, 0], sizes = [1, 256], strides = [1, 1]} : vector<9x256xbf16> to vector<1x256xbf16>
    %12 = vector.broadcast %11 : vector<1x256xbf16> to vector<8x256xbf16>
    %13 = arith.mulf %10, %12 : vector<8x256xbf16>
    %14 = vector.extract_strided_slice %0 {offsets = [0, 241], sizes = [8, 15], strides = [1, 1]} : vector<8x256xbf16> to vector<8x15xbf16>
    %15 = vector.extract_strided_slice %0 {offsets = [0, 0], sizes = [8, 241], strides = [1, 1]} : vector<8x256xbf16> to vector<8x241xbf16>
    %16 = tpu.concatenate %14, %15 in 1 : vector<8x15xbf16>, vector<8x241xbf16> -> vector<8x256xbf16>
    %17 = vector.extract_strided_slice %1 {offsets = [2, 0], sizes = [1, 256], strides = [1, 1]} : vector<9x256xbf16> to vector<1x256xbf16>
    %18 = vector.broadcast %17 : vector<1x256xbf16> to vector<8x256xbf16>
    %19 = arith.mulf %16, %18 : vector<8x256xbf16>
    %20 = vector.extract_strided_slice %0 {offsets = [0, 255], sizes = [8, 1], strides = [1, 1]} : vector<8x256xbf16> to vector<8x1xbf16>
    %21 = vector.extract_strided_slice %0 {offsets = [0, 0], sizes = [8, 255], strides = [1, 1]} : vector<8x256xbf16> to vector<8x255xbf16>
    %22 = tpu.concatenate %20, %21 in 1 : vector<8x1xbf16>, vector<8x255xbf16> -> vector<8x256xbf16>
    %23 = vector.extract_strided_slice %1 {offsets = [3, 0], sizes = [1, 256], strides = [1, 1]} : vector<9x256xbf16> to vector<1x256xbf16>
    %24 = vector.broadcast %23 : vector<1x256xbf16> to vector<8x256xbf16>
    %25 = arith.mulf %22, %24 : vector<8x256xbf16>
    %26 = vector.extract_strided_slice %1 {offsets = [4, 0], sizes = [1, 256], strides = [1, 1]} : vector<9x256xbf16> to vector<1x256xbf16>
    %27 = vector.broadcast %26 : vector<1x256xbf16> to vector<8x256xbf16>
    %28 = arith.mulf %0, %27 : vector<8x256xbf16>
    %29 = vector.extract_strided_slice %0 {offsets = [0, 1], sizes = [8, 255], strides = [1, 1]} : vector<8x256xbf16> to vector<8x255xbf16>
    %30 = vector.extract_strided_slice %0 {offsets = [0, 0], sizes = [8, 1], strides = [1, 1]} : vector<8x256xbf16> to vector<8x1xbf16>
    %31 = tpu.concatenate %29, %30 in 1 : vector<8x255xbf16>, vector<8x1xbf16> -> vector<8x256xbf16>
    %32 = vector.extract_strided_slice %1 {offsets = [5, 0], sizes = [1, 256], strides = [1, 1]} : vector<9x256xbf16> to vector<1x256xbf16>
    %33 = vector.broadcast %32 : vector<1x256xbf16> to vector<8x256xbf16>
    %34 = arith.mulf %31, %33 : vector<8x256xbf16>
    %35 = vector.extract_strided_slice %0 {offsets = [0, 15], sizes = [8, 241], strides = [1, 1]} : vector<8x256xbf16> to vector<8x241xbf16>
    %36 = vector.extract_strided_slice %0 {offsets = [0, 0], sizes = [8, 15], strides = [1, 1]} : vector<8x256xbf16> to vector<8x15xbf16>
    %37 = tpu.concatenate %35, %36 in 1 : vector<8x241xbf16>, vector<8x15xbf16> -> vector<8x256xbf16>
    %38 = vector.extract_strided_slice %1 {offsets = [6, 0], sizes = [1, 256], strides = [1, 1]} : vector<9x256xbf16> to vector<1x256xbf16>
    %39 = vector.broadcast %38 : vector<1x256xbf16> to vector<8x256xbf16>
    %40 = arith.mulf %37, %39 : vector<8x256xbf16>
    %41 = vector.extract_strided_slice %0 {offsets = [0, 16], sizes = [8, 240], strides = [1, 1]} : vector<8x256xbf16> to vector<8x240xbf16>
    %42 = vector.extract_strided_slice %0 {offsets = [0, 0], sizes = [8, 16], strides = [1, 1]} : vector<8x256xbf16> to vector<8x16xbf16>
    %43 = tpu.concatenate %41, %42 in 1 : vector<8x240xbf16>, vector<8x16xbf16> -> vector<8x256xbf16>
    %44 = vector.extract_strided_slice %1 {offsets = [7, 0], sizes = [1, 256], strides = [1, 1]} : vector<9x256xbf16> to vector<1x256xbf16>
    %45 = vector.broadcast %44 : vector<1x256xbf16> to vector<8x256xbf16>
    %46 = arith.mulf %43, %45 : vector<8x256xbf16>
    %47 = vector.extract_strided_slice %0 {offsets = [0, 17], sizes = [8, 239], strides = [1, 1]} : vector<8x256xbf16> to vector<8x239xbf16>
    %48 = vector.extract_strided_slice %0 {offsets = [0, 0], sizes = [8, 17], strides = [1, 1]} : vector<8x256xbf16> to vector<8x17xbf16>
    %49 = tpu.concatenate %47, %48 in 1 : vector<8x239xbf16>, vector<8x17xbf16> -> vector<8x256xbf16>
    %50 = vector.extract_strided_slice %1 {offsets = [8, 0], sizes = [1, 256], strides = [1, 1]} : vector<9x256xbf16> to vector<1x256xbf16>
    %51 = vector.broadcast %50 : vector<1x256xbf16> to vector<8x256xbf16>
    %52 = arith.mulf %49, %51 : vector<8x256xbf16>
    %53 = tpu.concatenate %7, %13, %19, %25, %28, %34, %40, %46, %52, %1 in 0 : vector<8x256xbf16>, vector<8x256xbf16>, vector<8x256xbf16>, vector<8x256xbf16>, vector<8x256xbf16>, vector<8x256xbf16>, vector<8x256xbf16>, vector<8x256xbf16>, vector<8x256xbf16>, vector<9x256xbf16> -> vector<81x256xbf16>
    %c0_3 = arith.constant 0 : index
    %c0_4 = arith.constant 0 : index
    %54 = vector.load %arg2[%c0_3, %c0_4] : memref<8x81xbf16, #tpu.memory_space<vmem>>, vector<8x81xbf16>
    %cst = arith.constant dense<0.000000e+00> : vector<8x256xf32>
    %55 = tpu.matmul %54, %53, %cst {dimension_numbers = #tpu.dot_dimension_numbers<[1], [0], [0], [1], [0, 0, 1, 1], [], []>} : vector<8x81xbf16>, vector<81x256xbf16>, vector<8x256xf32> -> vector<8x256xf32>
    %56 = arith.truncf %55 : vector<8x256xf32> to vector<8x256xbf16>
    %c0_5 = arith.constant 0 : index
    %c0_6 = arith.constant 0 : index
    %57 = vector.load %arg4[%c0_5, %c0_6] : memref<8x256xbf16, #tpu.memory_space<vmem>>, vector<8x256xbf16>
    tpu.vector_store %arg4[%c0_5, %c0_6], %56 {strides = array<i32>} : memref<8x256xbf16, #tpu.memory_space<vmem>>, vector<8x256xbf16>,
    %cst_7 = arith.constant dense<0.000000e+00> : vector<8xf32>
    %58 = vector.multi_reduction <add>, %55, %cst_7 [1] : vector<8x256xf32> to vector<8xf32>
    %59 = vector.shape_cast %58 : vector<8xf32> to vector<8x1xf32>
    %60 = arith.mulf %55, %55 : vector<8x256xf32>
    %cst_8 = arith.constant dense<0.000000e+00> : vector<8xf32>
    %61 = vector.multi_reduction <add>, %60, %cst_8 [1] : vector<8x256xf32> to vector<8xf32>
    %62 = vector.shape_cast %61 : vector<8xf32> to vector<8x1xf32>
    %63 = tpu.concatenate %59, %62 in 1 : vector<8x1xf32>, vector<8x1xf32> -> vector<8x2xf32>
    %c0_9 = arith.constant 0 : index
    %c0_10 = arith.constant 0 : index
    %c0_11 = arith.constant 0 : index
    %64 = vector.load %arg5[%c0_9, %c0_10, %c0_11] : memref<1x8x2xf32, #tpu.memory_space<vmem>>, vector<1x8x2xf32>
    %65 = vector.shape_cast %64 : vector<1x8x2xf32> to vector<8x2xf32>
    %66 = vector.shape_cast %63 : vector<8x2xf32> to vector<1x8x2xf32>
    tpu.vector_store %arg5[%c0_9, %c0_10, %c0_11], %66 {strides = array<i32>} : memref<1x8x2xf32, #tpu.memory_space<vmem>>, vector<1x8x2xf32>,
    return
  }
  func.func @transform_0(%arg0: i32) -> (i32, i32) {
    %c0_i32 = arith.constant 0 : i32
    %c0_i32_0 = arith.constant 0 : i32
    return %c0_i32, %arg0 : i32, i32
  }
  func.func @transform_1(%arg0: i32) -> (i32, i32) {
    %c0_i32 = arith.constant 0 : i32
    %c0_i32_0 = arith.constant 0 : i32
    %c0_i32_1 = arith.constant 0 : i32
    return %c0_i32, %c0_i32_0 : i32, i32
  }
  func.func @transform_2(%arg0: i32) -> (i32, i32) {
    %c0_i32 = arith.constant 0 : i32
    %c0_i32_0 = arith.constant 0 : i32
    %c0_i32_1 = arith.constant 0 : i32
    return %c0_i32, %c0_i32_0 : i32, i32
  }
  func.func @transform_3(%arg0: i32) -> (i32, i32) {
    %c0_i32 = arith.constant 0 : i32
    %c0_i32_0 = arith.constant 0 : i32
    return %c0_i32, %arg0 : i32, i32
  }
  func.func @transform_4(%arg0: i32) -> (i32, i32, i32) {
    %c0_i32 = arith.constant 0 : i32
    %c0_i32_0 = arith.constant 0 : i32
    %c0_i32_1 = arith.constant 0 : i32
    return %arg0, %c0_i32, %c0_i32_0 : i32, i32, i32
  }
}

module attributes {stable_mosaic.version = 11 : i64} {
  func.func @kernel(%arg0: i32, %arg1: memref<8x128xbf16, #tpu.memory_space<vmem>>, %arg2: memref<16x8xbf16, #tpu.memory_space<vmem>>, %arg3: memref<16x1xf32, #tpu.memory_space<vmem>>, %arg4: memref<16x128xbf16, #tpu.memory_space<vmem>>, %arg5: memref<1x16x2xf32, #tpu.memory_space<vmem>>) attributes {dimension_semantics = [#tpu.dimension_semantics<parallel>], iteration_bounds = array<i64: 1>, scalar_prefetch = 0 : i64, scratch_operands = 0 : i64, tpu.core_type = #tpu.core_type<tc>, window_params = [{transform_indices = @transform_0, window_bounds = array<i64: 8, 128>}, {pipeline_mode = #tpu.pipeline_mode<synchronous>, transform_indices = @transform_1, window_bounds = array<i64: 16, 8>}, {pipeline_mode = #tpu.pipeline_mode<synchronous>, transform_indices = @transform_2, window_bounds = array<i64: 16, 1>}, {transform_indices = @transform_3, window_bounds = array<i64: 16, 128>}, {transform_indices = @transform_4, window_bounds = array<i64: 1, 16, 2>}]} {
    %c0 = arith.constant 0 : index
    %c0_0 = arith.constant 0 : index
    %0 = vector.load %arg2[%c0, %c0_0] : memref<16x8xbf16, #tpu.memory_space<vmem>>, vector<16x8xbf16>
    %c0_1 = arith.constant 0 : index
    %c0_2 = arith.constant 0 : index
    %1 = vector.load %arg1[%c0_1, %c0_2] : memref<8x128xbf16, #tpu.memory_space<vmem>>, vector<8x128xbf16>
    %cst = arith.constant dense<0.000000e+00> : vector<16x128xf32>
    %2 = tpu.matmul %0, %1, %cst {dimension_numbers = #tpu.dot_dimension_numbers<[1], [0], [0], [1], [0, 0, 1, 1], [], []>} : vector<16x8xbf16>, vector<8x128xbf16>, vector<16x128xf32> -> vector<16x128xf32>
    %c0_3 = arith.constant 0 : index
    %c0_4 = arith.constant 0 : index
    %3 = vector.load %arg3[%c0_3, %c0_4] : memref<16x1xf32, #tpu.memory_space<vmem>>, vector<16x1xf32>
    %4 = vector.broadcast %3 : vector<16x1xf32> to vector<16x128xf32>
    %5 = arith.addf %2, %4 : vector<16x128xf32>
    %6 = arith.truncf %5 : vector<16x128xf32> to vector<16x128xbf16>
    %c0_5 = arith.constant 0 : index
    %c0_6 = arith.constant 0 : index
    %7 = vector.load %arg4[%c0_5, %c0_6] : memref<16x128xbf16, #tpu.memory_space<vmem>>, vector<16x128xbf16>
    tpu.vector_store %arg4[%c0_5, %c0_6], %6 {strides = array<i32>} : memref<16x128xbf16, #tpu.memory_space<vmem>>, vector<16x128xbf16>,
    %cst_7 = arith.constant dense<0.000000e+00> : vector<16xf32>
    %8 = vector.multi_reduction <add>, %5, %cst_7 [1] : vector<16x128xf32> to vector<16xf32>
    %9 = vector.shape_cast %8 : vector<16xf32> to vector<16x1xf32>
    %10 = arith.mulf %5, %5 : vector<16x128xf32>
    %cst_8 = arith.constant dense<0.000000e+00> : vector<16xf32>
    %11 = vector.multi_reduction <add>, %10, %cst_8 [1] : vector<16x128xf32> to vector<16xf32>
    %12 = vector.shape_cast %11 : vector<16xf32> to vector<16x1xf32>
    %13 = tpu.concatenate %9, %12 in 1 : vector<16x1xf32>, vector<16x1xf32> -> vector<16x2xf32>
    %c0_9 = arith.constant 0 : index
    %c0_10 = arith.constant 0 : index
    %c0_11 = arith.constant 0 : index
    %14 = vector.load %arg5[%c0_9, %c0_10, %c0_11] : memref<1x16x2xf32, #tpu.memory_space<vmem>>, vector<1x16x2xf32>
    %15 = vector.shape_cast %14 : vector<1x16x2xf32> to vector<16x2xf32>
    %16 = vector.shape_cast %13 : vector<16x2xf32> to vector<1x16x2xf32>
    tpu.vector_store %arg5[%c0_9, %c0_10, %c0_11], %16 {strides = array<i32>} : memref<1x16x2xf32, #tpu.memory_space<vmem>>, vector<1x16x2xf32>,
    return
  }
  func.func @transform_0(%arg0: i32) -> (i32, i32) {
    %c0_i32 = arith.constant 0 : i32
    %c0_i32_0 = arith.constant 0 : i32
    return %c0_i32, %arg0 : i32, i32
  }
  func.func @transform_1(%arg0: i32) -> (i32, i32) {
    %c0_i32 = arith.constant 0 : i32
    %c0_i32_0 = arith.constant 0 : i32
    %c0_i32_1 = arith.constant 0 : i32
    return %c0_i32, %c0_i32_0 : i32, i32
  }
  func.func @transform_2(%arg0: i32) -> (i32, i32) {
    %c0_i32 = arith.constant 0 : i32
    %c0_i32_0 = arith.constant 0 : i32
    %c0_i32_1 = arith.constant 0 : i32
    return %c0_i32, %c0_i32_0 : i32, i32
  }
  func.func @transform_3(%arg0: i32) -> (i32, i32) {
    %c0_i32 = arith.constant 0 : i32
    %c0_i32_0 = arith.constant 0 : i32
    return %c0_i32, %arg0 : i32, i32
  }
  func.func @transform_4(%arg0: i32) -> (i32, i32, i32) {
    %c0_i32 = arith.constant 0 : i32
    %c0_i32_0 = arith.constant 0 : i32
    %c0_i32_1 = arith.constant 0 : i32
    return %arg0, %c0_i32, %c0_i32_0 : i32, i32, i32
  }
}

module attributes {stable_mosaic.version = 11 : i64} {
  func.func @kernel(%arg0: i32, %arg1: memref<8x128xbf16, #tpu.memory_space<vmem>>, %arg2: memref<16x8xbf16, #tpu.memory_space<vmem>>, %arg3: memref<16x128xbf16, #tpu.memory_space<vmem>>, %arg4: memref<1x16x2xf32, #tpu.memory_space<vmem>>) attributes {dimension_semantics = [#tpu.dimension_semantics<parallel>], iteration_bounds = array<i64: 1>, scalar_prefetch = 0 : i64, scratch_operands = 0 : i64, tpu.core_type = #tpu.core_type<tc>, window_params = [{transform_indices = @transform_0, window_bounds = array<i64: 8, 128>}, {pipeline_mode = #tpu.pipeline_mode<synchronous>, transform_indices = @transform_1, window_bounds = array<i64: 16, 8>}, {transform_indices = @transform_2, window_bounds = array<i64: 16, 128>}, {transform_indices = @transform_3, window_bounds = array<i64: 1, 16, 2>}]} {
    %c0 = arith.constant 0 : index
    %c0_0 = arith.constant 0 : index
    %0 = vector.load %arg2[%c0, %c0_0] : memref<16x8xbf16, #tpu.memory_space<vmem>>, vector<16x8xbf16>
    %c0_1 = arith.constant 0 : index
    %c0_2 = arith.constant 0 : index
    %1 = vector.load %arg1[%c0_1, %c0_2] : memref<8x128xbf16, #tpu.memory_space<vmem>>, vector<8x128xbf16>
    %cst = arith.constant dense<0.000000e+00> : vector<16x128xf32>
    %2 = tpu.matmul %0, %1, %cst {dimension_numbers = #tpu.dot_dimension_numbers<[1], [0], [0], [1], [0, 0, 1, 1], [], []>} : vector<16x8xbf16>, vector<8x128xbf16>, vector<16x128xf32> -> vector<16x128xf32>
    %3 = arith.truncf %2 : vector<16x128xf32> to vector<16x128xbf16>
    %c0_3 = arith.constant 0 : index
    %c0_4 = arith.constant 0 : index
    %4 = vector.load %arg3[%c0_3, %c0_4] : memref<16x128xbf16, #tpu.memory_space<vmem>>, vector<16x128xbf16>
    tpu.vector_store %arg3[%c0_3, %c0_4], %3 {strides = array<i32>} : memref<16x128xbf16, #tpu.memory_space<vmem>>, vector<16x128xbf16>,
    %cst_5 = arith.constant dense<0.000000e+00> : vector<16xf32>
    %5 = vector.multi_reduction <add>, %2, %cst_5 [1] : vector<16x128xf32> to vector<16xf32>
    %6 = vector.shape_cast %5 : vector<16xf32> to vector<16x1xf32>
    %7 = arith.mulf %2, %2 : vector<16x128xf32>
    %cst_6 = arith.constant dense<0.000000e+00> : vector<16xf32>
    %8 = vector.multi_reduction <add>, %7, %cst_6 [1] : vector<16x128xf32> to vector<16xf32>
    %9 = vector.shape_cast %8 : vector<16xf32> to vector<16x1xf32>
    %10 = tpu.concatenate %6, %9 in 1 : vector<16x1xf32>, vector<16x1xf32> -> vector<16x2xf32>
    %c0_7 = arith.constant 0 : index
    %c0_8 = arith.constant 0 : index
    %c0_9 = arith.constant 0 : index
    %11 = vector.load %arg4[%c0_7, %c0_8, %c0_9] : memref<1x16x2xf32, #tpu.memory_space<vmem>>, vector<1x16x2xf32>
    %12 = vector.shape_cast %11 : vector<1x16x2xf32> to vector<16x2xf32>
    %13 = vector.shape_cast %10 : vector<16x2xf32> to vector<1x16x2xf32>
    tpu.vector_store %arg4[%c0_7, %c0_8, %c0_9], %13 {strides = array<i32>} : memref<1x16x2xf32, #tpu.memory_space<vmem>>, vector<1x16x2xf32>,
    return
  }
  func.func @transform_0(%arg0: i32) -> (i32, i32) {
    %c0_i32 = arith.constant 0 : i32
    %c0_i32_0 = arith.constant 0 : i32
    return %c0_i32, %arg0 : i32, i32
  }
  func.func @transform_1(%arg0: i32) -> (i32, i32) {
    %c0_i32 = arith.constant 0 : i32
    %c0_i32_0 = arith.constant 0 : i32
    %c0_i32_1 = arith.constant 0 : i32
    return %c0_i32, %c0_i32_0 : i32, i32
  }
  func.func @transform_2(%arg0: i32) -> (i32, i32) {
    %c0_i32 = arith.constant 0 : i32
    %c0_i32_0 = arith.constant 0 : i32
    return %c0_i32, %arg0 : i32, i32
  }
  func.func @transform_3(%arg0: i32) -> (i32, i32, i32) {
    %c0_i32 = arith.constant 0 : i32
    %c0_i32_0 = arith.constant 0 : i32
    %c0_i32_1 = arith.constant 0 : i32
    return %arg0, %c0_i32, %c0_i32_0 : i32, i32, i32
  }
}

module attributes {stable_mosaic.version = 11 : i64} {
  func.func @_bn_relu_add_kernel(%arg0: i32, %arg1: memref<16x128xbf16, #tpu.memory_space<vmem>>, %arg2: memref<16x128xbf16, #tpu.memory_space<vmem>>, %arg3: memref<16x1xf32, #tpu.memory_space<vmem>>, %arg4: memref<16x1xf32, #tpu.memory_space<vmem>>, %arg5: memref<16x1xf32, #tpu.memory_space<vmem>>, %arg6: memref<16x1xf32, #tpu.memory_space<vmem>>, %arg7: memref<16x128xf32, #tpu.memory_space<vmem>>) attributes {dimension_semantics = [#tpu.dimension_semantics<parallel>], iteration_bounds = array<i64: 1>, scalar_prefetch = 0 : i64, scratch_operands = 0 : i64, tpu.core_type = #tpu.core_type<tc>, window_params = [{transform_indices = @transform_0, window_bounds = array<i64: 16, 128>}, {transform_indices = @transform_1, window_bounds = array<i64: 16, 128>}, {pipeline_mode = #tpu.pipeline_mode<synchronous>, transform_indices = @transform_2, window_bounds = array<i64: 16, 1>}, {pipeline_mode = #tpu.pipeline_mode<synchronous>, transform_indices = @transform_3, window_bounds = array<i64: 16, 1>}, {pipeline_mode = #tpu.pipeline_mode<synchronous>, transform_indices = @transform_4, window_bounds = array<i64: 16, 1>}, {pipeline_mode = #tpu.pipeline_mode<synchronous>, transform_indices = @transform_5, window_bounds = array<i64: 16, 1>}, {transform_indices = @transform_6, window_bounds = array<i64: 16, 128>}]} {
    %c0 = arith.constant 0 : index
    %c0_0 = arith.constant 0 : index
    %0 = vector.load %arg1[%c0, %c0_0] : memref<16x128xbf16, #tpu.memory_space<vmem>>, vector<16x128xbf16>
    %1 = arith.extf %0 : vector<16x128xbf16> to vector<16x128xf32>
    %c0_1 = arith.constant 0 : index
    %c0_2 = arith.constant 0 : index
    %2 = vector.load %arg3[%c0_1, %c0_2] : memref<16x1xf32, #tpu.memory_space<vmem>>, vector<16x1xf32>
    %3 = vector.broadcast %2 : vector<16x1xf32> to vector<16x128xf32>
    %4 = arith.mulf %1, %3 : vector<16x128xf32>
    %c0_3 = arith.constant 0 : index
    %c0_4 = arith.constant 0 : index
    %5 = vector.load %arg4[%c0_3, %c0_4] : memref<16x1xf32, #tpu.memory_space<vmem>>, vector<16x1xf32>
    %6 = vector.broadcast %5 : vector<16x1xf32> to vector<16x128xf32>
    %7 = arith.addf %4, %6 : vector<16x128xf32>
    %cst = arith.constant 0.000000e+00 : f32
    %8 = vector.broadcast %cst : f32 to vector<16x128xf32>
    %9 = arith.maximumf %7, %8 : vector<16x128xf32>
    %c0_5 = arith.constant 0 : index
    %c0_6 = arith.constant 0 : index
    %10 = vector.load %arg2[%c0_5, %c0_6] : memref<16x128xbf16, #tpu.memory_space<vmem>>, vector<16x128xbf16>
    %11 = arith.extf %10 : vector<16x128xbf16> to vector<16x128xf32>
    %c0_7 = arith.constant 0 : index
    %c0_8 = arith.constant 0 : index
    %12 = vector.load %arg5[%c0_7, %c0_8] : memref<16x1xf32, #tpu.memory_space<vmem>>, vector<16x1xf32>
    %13 = vector.broadcast %12 : vector<16x1xf32> to vector<16x128xf32>
    %14 = arith.mulf %11, %13 : vector<16x128xf32>
    %c0_9 = arith.constant 0 : index
    %c0_10 = arith.constant 0 : index
    %15 = vector.load %arg6[%c0_9, %c0_10] : memref<16x1xf32, #tpu.memory_space<vmem>>, vector<16x1xf32>
    %16 = vector.broadcast %15 : vector<16x1xf32> to vector<16x128xf32>
    %17 = arith.addf %14, %16 : vector<16x128xf32>
    %18 = arith.addf %9, %17 : vector<16x128xf32>
    %c0_11 = arith.constant 0 : index
    %c0_12 = arith.constant 0 : index
    %19 = vector.load %arg7[%c0_11, %c0_12] : memref<16x128xf32, #tpu.memory_space<vmem>>, vector<16x128xf32>
    tpu.vector_store %arg7[%c0_11, %c0_12], %18 {strides = array<i32>} : memref<16x128xf32, #tpu.memory_space<vmem>>, vector<16x128xf32>,
    return
  }
  func.func @transform_0(%arg0: i32) -> (i32, i32) {
    %c0_i32 = arith.constant 0 : i32
    %c0_i32_0 = arith.constant 0 : i32
    return %c0_i32, %arg0 : i32, i32
  }
  func.func @transform_1(%arg0: i32) -> (i32, i32) {
    %c0_i32 = arith.constant 0 : i32
    %c0_i32_0 = arith.constant 0 : i32
    return %c0_i32, %arg0 : i32, i32
  }
  func.func @transform_2(%arg0: i32) -> (i32, i32) {
    %c0_i32 = arith.constant 0 : i32
    %c0_i32_0 = arith.constant 0 : i32
    %c0_i32_1 = arith.constant 0 : i32
    return %c0_i32, %c0_i32_0 : i32, i32
  }
  func.func @transform_3(%arg0: i32) -> (i32, i32) {
    %c0_i32 = arith.constant 0 : i32
    %c0_i32_0 = arith.constant 0 : i32
    %c0_i32_1 = arith.constant 0 : i32
    return %c0_i32, %c0_i32_0 : i32, i32
  }
  func.func @transform_4(%arg0: i32) -> (i32, i32) {
    %c0_i32 = arith.constant 0 : i32
    %c0_i32_0 = arith.constant 0 : i32
    %c0_i32_1 = arith.constant 0 : i32
    return %c0_i32, %c0_i32_0 : i32, i32
  }
  func.func @transform_5(%arg0: i32) -> (i32, i32) {
    %c0_i32 = arith.constant 0 : i32
    %c0_i32_0 = arith.constant 0 : i32
    %c0_i32_1 = arith.constant 0 : i32
    return %c0_i32, %c0_i32_0 : i32, i32
  }
  func.func @transform_6(%arg0: i32) -> (i32, i32) {
    %c0_i32 = arith.constant 0 : i32
    %c0_i32_0 = arith.constant 0 : i32
    return %c0_i32, %arg0 : i32, i32
  }
}

</mosaic_0001>

<llo_original>
// kernel: tpu_custom_call.1
$region0: #{tpu_custom_call.1}
  #allocation0 [shape = 'u32[]', space=smem, size = 0x4, offset = 0x4, fixed_abs, tag = 'smem constant byte address 0x4 - core index']
  #allocation1 [shape = 'u32[144,128]{1,0:T(1,128)}', space=vmem, size = 0x12000, scoped, tag = 'internal scratch']
  %s0 = inlined_call_operand.hbm [shape: f32[8,128], index: 0, kind: input, shape index: {}]
  %s1 = inlined_call_operand.hbm [shape: f32[8,128], index: 1, kind: output, shape index: {}]
  %s2 = sld [smem:[#allocation0]]
  $region18: #{tpu_custom_call.1} parent=0
    _
  %s4 = ssub.s32 1, %s2
  %s5 = scalar_select 0, %s4, %s2
  $region1: #{tpu_custom_call.1} parent=0
    #allocation2 [shape = 'u8[4096]{0}', space=vmem, size = 0x1000, scoped, tag = 'input window, operand 0, single buffered']
    #allocation3 [shape = 's32[1]{0}', space=sflag, size = 0x4, scoped, tag = 'scoped memory for tpu_custom_call.1']
    #allocation4 [shape = 's32[1]{0}', space=sflag, size = 0x4, scoped, tag = 'scoped memory for tpu_custom_call.1']
    #allocation5 [shape = 'u8[4096]{0}', space=vmem, size = 0x1000, scoped, tag = 'output window, operand 0, single buffered']
    %6 = vsyncpa [#allocation3], 0
    %7 = vsyncpa [#allocation4], 0
    // Predicated region
    $region2: #{tpu_custom_call.1} parent=1 // pred_check
      _
    $region3: #{tpu_custom_call.1} parent=1 // pred_check_branch
      %9 = sbr.rel (0) target = $region5
    $region4: #{tpu_custom_call.1} parent=1 // pred_region
      %s11 = ssub.s32 128, 128
      %12 = vsyncadd [#allocation3], %s11
      %s14 = sshll.u32 [#allocation2], 4
      %s15 = int_to_ptr.vmem [resolvable:$true] %s14
      %17 = dma.hbm_to_vmem [thread:$0]  %s0, 128, %s15, [#allocation3]
    $region5: #{tpu_custom_call.1} parent=1 // pred_fallthru
      _
    // Predicated region
    $region6: #{tpu_custom_call.1} parent=1 // pred_check
      _
    $region7: #{tpu_custom_call.1} parent=1 // pred_check_branch
      %19 = sbr.rel (0) target = $region9
    $region8: #{tpu_custom_call.1} parent=1 // pred_region
      %20 = dma.done [#allocation3], 128
    $region9: #{tpu_custom_call.1} parent=1 // pred_fallthru
      _
    %v21 = vld [vmem:[#allocation2] sm:$0xff]
    %22 = vrot.lane.b32.xlu0 %v21, 1
    %v23 = vpop.permute.xlu0 %22
    %24 = vst [vmem:[#allocation5] sm:$0xff] %v23
    // Predicated region
    $region10: #{tpu_custom_call.1} parent=1 // pred_check
      _
    $region11: #{tpu_custom_call.1} parent=1 // pred_check_branch
      %26 = sbr.rel (0) target = $region13
    $region12: #{tpu_custom_call.1} parent=1 // pred_region
      %s28 = ssub.s32 128, 128
      %29 = vsyncadd [#allocation4], %s28
      %s31 = sshll.u32 [#allocation5], 4
      %s32 = int_to_ptr.vmem [resolvable:$true] %s31
      %34 = dma.vmem_to_hbm [thread:$0]  %s32, 128, %s1, [#allocation4]
    $region13: #{tpu_custom_call.1} parent=1 // pred_fallthru
      _
    // Predicated region
    $region14: #{tpu_custom_call.1} parent=1 // pred_check
      _
    $region15: #{tpu_custom_call.1} parent=1 // pred_check_branch
      %36 = sbr.rel (0) target = $region17
    $region16: #{tpu_custom_call.1} parent=1 // pred_region
      %37 = dma.done [#allocation4], 128
    $region17: #{tpu_custom_call.1} parent=1 // pred_fallthru
      _
    %38 = vsyncpa [#allocation3], 1
    %39 = vsyncpa [#allocation4], 1

// kernel: conv_residual_bottleneck_forward.5
$region0: #{conv_residual_bottleneck_forward.5}
  #allocation0 [shape = 'u32[]', space=smem, size = 0x4, offset = 0x4, fixed_abs, tag = 'smem constant byte address 0x4 - core index']
  #allocation1 [shape = 'u32[144,128]{1,0:T(1,128)}', space=vmem, size = 0x12000, scoped, tag = 'internal scratch']
  %s0 = inlined_call_operand.vmem [shape: bf16[8,512], index: 0, kind: input, shape index: {}]
  %s1 = inlined_call_operand.vmem [shape: bf16[8,8], index: 1, kind: input, shape index: {}]
  %s2 = inlined_call_operand.vmem [shape: bf16[8,512], index: 2, kind: output, shape index: {0}]
  %s3 = inlined_call_operand.vmem [shape: f32[1,8,2], index: 3, kind: output, shape index: {1}]
  %4 = xla_tuple %s2, %s3
  %s5 = sld [smem:[#allocation0]]
  $region26: #{conv_residual_bottleneck_forward.5} parent=0
    _
  %s7 = ssub.s32 1, %s5
  %s8 = scalar_select 0, %s7, %s5
  // Predicated region
  $region2: #{conv_residual_bottleneck_forward.5} parent=0 // pred_check
    _
  $region3: #{conv_residual_bottleneck_forward.5} parent=0 // pred_check_branch
    %10 = sbr.rel (0) target = $region5
  $region4: #{conv_residual_bottleneck_forward.5} parent=0 // pred_region
    _
  $region5: #{conv_residual_bottleneck_forward.5} parent=0 // pred_fallthru
    _
  // Predicated region
  $region6: #{conv_residual_bottleneck_forward.5} parent=0 // pred_check
    _
  $region7: #{conv_residual_bottleneck_forward.5} parent=0 // pred_check_branch
    %12 = sbr.rel (0) target = $region9
  $region8: #{conv_residual_bottleneck_forward.5} parent=0 // pred_region
    _
  $region9: #{conv_residual_bottleneck_forward.5} parent=0 // pred_fallthru
    _
  %v14 = vld [vmem:[%s1] sm:$0xf]
  %v15 = vld [vmem:[%s0] sm:$0xff]
  %v16 = vld [vmem:[%s0 + $0x8] sm:$0xff]
  %v19 = vunpack.c.l.b16 %v15
  %v20 = vunpack.c.h.b16 %v15
  %v21 = vunpack.c.l.b16 %v16
  %v22 = vunpack.c.h.b16 %v16
  %v23 = vpack.c.b16 %v19, %v19
  %v24 = vpack.c.b16 %v20, %v20
  %v25 = vpack.c.b16 %v21, %v21
  %v26 = vpack.c.b16 %v22, %v22
  %vm27 = vcmask 64512
  %v29 = vsel %vm27, %v14, 0
  %vm31 = vcmask 1043456
  %v33 = vsel %vm31, %v23, 0
  %v36 = vsel %vm31, %v24, 0
  %v39 = vsel %vm31, %v25, 0
  %v42 = vsel %vm31, %v26, 0
  %44 = vmatprep.subr.bf16.mxu0 0
  %45 = vmatpush1.bf16.msra.mxu0 0
  %46 = vmatprep.subr.bf16.mxu0 0
  %47 = vmatpush1.bf16.msra.mxu0 0
  %48 = vmatprep.subr.bf16.mxu0 0
  %49 = vmatpush1.bf16.msra.mxu0 0
  %50 = vmatprep.subr.bf16.mxu0 0
  %51 = vmatpush1.bf16.msra.mxu0 0
  %52 = vmatprep.subr.bf16.mxu0 0
  %53 = vmatpush1.bf16.msra.mxu0 0
  %54 = vmatprep.subr.bf16.mxu0 0
  %55 = vmatpush1.bf16.msra.mxu0 0
  %56 = vmatprep.subr.bf16.mxu0 0
  %57 = vmatpush1.bf16.msra.mxu0 0
  %58 = vmatprep.subr.bf16.mxu0 %v36
  %59 = vmatpush1.bf16.msra.mxu0 %v33
  %60 = vmatprep.subr.bf16.mxu0 0
  %61 = vmatpush2.bf16.msra.mxu0 0
  %62 = vmatprep.subr.bf16.mxu0 0
  %63 = vmatpush2.bf16.msra.mxu0 0
  %64 = vmatprep.subr.bf16.mxu0 0
  %65 = vmatpush2.bf16.msra.mxu0 0
  %66 = vmatprep.subr.bf16.mxu0 0
  %67 = vmatpush2.bf16.msra.mxu0 0
  %68 = vmatprep.subr.bf16.mxu0 0
  %69 = vmatpush2.bf16.msra.mxu0 0
  %70 = vmatprep.subr.bf16.mxu0 0
  %71 = vmatpush2.bf16.msra.mxu0 0
  %72 = vmatprep.subr.bf16.mxu0 0
  %73 = vmatpush2.bf16.msra.mxu0 0
  %74 = vmatprep.subr.bf16.mxu0 0
  %75 = vmatpush2.bf16.msra.mxu0 0
  %76 = vmatprep.mubr.bf16.mxu0 0
  %77 = vmatmul.mubr.bf16.gmra.mxu0 %v29
  %v78 = vpop.f32.mrf.mxu0
  %v79 = vadd.f32 0.0, %v78
  %v80 = vpop.f32.mrf.mxu0
  %v81 = vadd.f32 0.0, %v80
  %v82 = vpop.f32.mrf.mxu0
  %v83 = vpop.f32.mrf.mxu0
  %84 = vdwg.mxu0
  %85 = vmatprep.subr.bf16.mxu0 0
  %86 = vmatpush1.bf16.msra.mxu0 0
  %87 = vmatprep.subr.bf16.mxu0 0
  %88 = vmatpush1.bf16.msra.mxu0 0
  %89 = vmatprep.subr.bf16.mxu0 0
  %90 = vmatpush1.bf16.msra.mxu0 0
  %91 = vmatprep.subr.bf16.mxu0 0
  %92 = vmatpush1.bf16.msra.mxu0 0
  %93 = vmatprep.subr.bf16.mxu0 0
  %94 = vmatpush1.bf16.msra.mxu0 0
  %95 = vmatprep.subr.bf16.mxu0 0
  %96 = vmatpush1.bf16.msra.mxu0 0
  %97 = vmatprep.subr.bf16.mxu0 0
  %98 = vmatpush1.bf16.msra.mxu0 0
  %99 = vmatprep.subr.bf16.mxu0 %v42
  %100 = vmatpush1.bf16.msra.mxu0 %v39
  %101 = vmatprep.subr.bf16.mxu0 0
  %102 = vmatpush2.bf16.msra.mxu0 0
  %103 = vmatprep.subr.bf16.mxu0 0
  %104 = vmatpush2.bf16.msra.mxu0 0
  %105 = vmatprep.subr.bf16.mxu0 0
  %106 = vmatpush2.bf16.msra.mxu0 0
  %107 = vmatprep.subr.bf16.mxu0 0
  %108 = vmatpush2.bf16.msra.mxu0 0
  %109 = vmatprep.subr.bf16.mxu0 0
  %110 = vmatpush2.bf16.msra.mxu0 0
  %111 = vmatprep.subr.bf16.mxu0 0
  %112 = vmatpush2.bf16.msra.mxu0 0
  %113 = vmatprep.subr.bf16.mxu0 0
  %114 = vmatpush2.bf16.msra.mxu0 0
  %115 = vmatprep.subr.bf16.mxu0 0
  %116 = vmatpush2.bf16.msra.mxu0 0
  %117 = vmatprep.mubr.bf16.mxu0 0
  %118 = vmatmul.mubr.bf16.gmra.mxu0 %v29
  %v119 = vpop.f32.mrf.mxu0
  %v120 = vadd.f32 0.0, %v119
  %v121 = vpop.f32.mrf.mxu0
  %v122 = vadd.f32 0.0, %v121
  %v123 = vpop.f32.mrf.mxu0
  %v124 = vpop.f32.mrf.mxu0
  %125 = vdwg.mxu0
  %v126 = vpack.c.bf16 %v79, %v79
  %v127 = vpack.c.bf16 %v81, %v81
  %v128 = vpack.c.bf16 %v120, %v120
  %v129 = vpack.c.bf16 %v122, %v122
  %v134 = vunpack.c.l.b16 %v126
  %v135 = vunpack.c.l.b16 %v127
  %v136 = vunpack.c.l.b16 %v128
  %v137 = vunpack.c.l.b16 %v129
  %v138 = vpack.c.b16 %v135, %v134
  %v139 = vpack.c.b16 %v137, %v136
  %142 = vst [vmem:[%s2] sm:$0xff] %v138
  %143 = vst [vmem:[%s2 + $0x8] sm:$0xff] %v139
  %v144 = vadd.f32 %v79, %v81
  %v145 = vadd.f32 %v144, %v120
  %v146 = vadd.f32 %v145, %v122
  %147 = vadd.xlane.f32.xlu0 %v146
  %v148 = vpop.xlane.xlu0 %147
  %v149 = vmul.f32 %v79, %v79
  %v150 = vmul.f32 %v81, %v81
  %v151 = vmul.f32 %v120, %v120
  %v152 = vmul.f32 %v122, %v122
  %v153 = vadd.f32 %v149, %v150
  %v154 = vadd.f32 %v153, %v151
  %v155 = vadd.f32 %v154, %v152
  %156 = vadd.xlane.f32.xlu0 %v155
  %v157 = vpop.xlane.xlu0 %156
  %vm158 = vcmask 7168
  %v159 = vsel %vm158, %v148, %v157
  %vm160 = vcmask 15360
  %161 = vst.msk [vmem:[%s3] sm:$0xff] %vm160, %v159
  // Predicated region
  $region10: #{conv_residual_bottleneck_forward.5} parent=0 // pred_check
    _
  $region11: #{conv_residual_bottleneck_forward.5} parent=0 // pred_check_branch
    %163 = sbr.rel (0) target = $region13
  $region12: #{conv_residual_bottleneck_forward.5} parent=0 // pred_region
    _
  $region13: #{conv_residual_bottleneck_forward.5} parent=0 // pred_fallthru
    _
  // Predicated region
  $region14: #{conv_residual_bottleneck_forward.5} parent=0 // pred_check
    _
  $region15: #{conv_residual_bottleneck_forward.5} parent=0 // pred_check_branch
    %165 = sbr.rel (0) target = $region17
  $region16: #{conv_residual_bottleneck_forward.5} parent=0 // pred_region
    _
  $region17: #{conv_residual_bottleneck_forward.5} parent=0 // pred_fallthru
    _
  // Predicated region
  $region18: #{conv_residual_bottleneck_forward.5} parent=0 // pred_check
    _
  $region19: #{conv_residual_bottleneck_forward.5} parent=0 // pred_check_branch
    %167 = sbr.rel (0) target = $region21
  $region20: #{conv_residual_bottleneck_forward.5} parent=0 // pred_region
    _
  $region21: #{conv_residual_bottleneck_forward.5} parent=0 // pred_fallthru
    _
  // Predicated region
  $region22: #{conv_residual_bottleneck_forward.5} parent=0 // pred_check
    _
  $region23: #{conv_residual_bottleneck_forward.5} parent=0 // pred_check_branch
    %169 = sbr.rel (0) target = $region25
  $region24: #{conv_residual_bottleneck_forward.5} parent=0 // pred_region
    _
  $region25: #{conv_residual_bottleneck_forward.5} parent=0 // pred_fallthru
    _

// kernel: conv_residual_bottleneck_forward.6
$region0: #{conv_residual_bottleneck_forward.6}
  #allocation0 [shape = 'u32[]', space=smem, size = 0x4, offset = 0x4, fixed_abs, tag = 'smem constant byte address 0x4 - core index']
  #allocation1 [shape = 'u32[144,128]{1,0:T(1,128)}', space=vmem, size = 0x12000, scoped, tag = 'internal scratch']
  %s0 = inlined_call_operand.vmem [shape: bf16[8,512], index: 0, kind: input, shape index: {}]
  %s1 = inlined_call_operand.vmem [shape: bf16[8,81], index: 1, kind: input, shape index: {}]
  %s2 = inlined_call_operand.vmem [shape: bf16[9,256], index: 2, kind: input, shape index: {}]
  %s3 = inlined_call_operand.vmem [shape: bf16[8,512], index: 3, kind: output, shape index: {0}]
  %s4 = inlined_call_operand.hbm [shape: f32[2,8,2], index: 4, kind: output, shape index: {1}]
  %5 = xla_tuple %s3, %s4
  %s6 = sld [smem:[#allocation0]]
  $region53: #{conv_residual_bottleneck_forward.6} parent=0
    _
  %s8 = ssub.s32 1, %s6
  %s9 = scalar_select 0, %s8, %s6
  $region1: #{conv_residual_bottleneck_forward.6} parent=0
    #allocation2 [shape = 'u8[8192]{0}', space=vmem, size = 0x2000, scoped, tag = 'output window, operand 1']
    #allocation3 [shape = 's32[2]{0}', space=sflag, size = 0x8, scoped, tag = 'scoped memory for conv_residual_bottleneck_forward.6']
    %10 = vsyncpa [#allocation3], 0
    %s11 = scalar_lea.sflag [#allocation3], 1
    %12 = vsyncpa %s11, 0
    loop: start=0, step=1, limit=4
    $region2: #{conv_residual_bottleneck_forward.6} parent=1 // loop_pre_header
      _
    $region3: #{conv_residual_bottleneck_forward.6} parent=1 // loop_header
      %s14 = sphi 0, %s18
      %p15 = scmp.ge.s32.totalorder %s14, 4
      %s24 = sphi 0, %s26
      %s27 = sphi 0, %s24
      %s28 = sphi 0, %s27
      %s44 = sphi 0, %s28
      %s48 = sphi 0, %s48
      %s50 = sphi 0, %s48
      %s51 = sphi 0, %s50
      %s65 = sphi 0, %s51
      %s69 = sphi 0, %s69
      %s71 = sphi 0, %s69
      %s72 = sphi 0, %s71
      %s86 = sphi 0, %s72
      %s92 = sphi 0, %s94
      %s95 = sphi 0, %s92
      %s96 = sphi 0, %s95
      %s112 = sphi 0, %s96
      %s118 = sphi 0, %s120
      %s121 = sphi 0, %s118
      %s122 = sphi 0, %s121
      %s138 = sphi 0, %s122
    $region4: #{conv_residual_bottleneck_forward.6} parent=1 // loop_header_branch
      %17 = sbr.rel (%p15) target = $region8
    $region5: #{conv_residual_bottleneck_forward.6} parent=1 // loop_body
      %s19 = ssub.s32 %s14, 1
      %s20 = ssub.s32 %s14, 2
      %s21 = sadd.s32 %s14, 1
      %s22 = ssub.s32 %s14, %s21
      %p23 = scmp.eq.s32.totalorder %s22, 0
      %s25 = sadd.s32 %s24, 1
      %s26 = scalar_select %p23, %s24, %s25
      %p29 = pneg %p23
      %p30 = scmp.eq.s32.totalorder %s14, 1
      %p31 = por %p29, %p30
      %p32 = scmp.ne.s32.totalorder %s24, %s27
      %p33 = scmp.eq.s32.totalorder %s14, 0
      %p34 = por %p32, %p33
      %p35 = scmp.ne.s32.totalorder %s24, %s27
      %p36 = scmp.eq.s32.totalorder %s19, 1
      %p37 = por %p35, %p36
      %p38 = scmp.ne.s32.totalorder %s27, %s28
      %p39 = scmp.eq.s32.totalorder %s19, 0
      %p40 = por %p38, %p39
      %p41 = scmp.ne.s32.totalorder %s27, %s28
      %p42 = scmp.eq.s32.totalorder %s20, 1
      %p43 = por %p41, %p42
      %p45 = scmp.ne.s32.totalorder %s28, %s44
      %p46 = scmp.eq.s32.totalorder %s20, 0
      %p47 = por %p45, %p46
      %s49 = sadd.s32 %s48, 1
      %p52 = scmp.eq.s32.totalorder %s14, 1
      %p53 = scmp.ne.s32.totalorder %s48, %s50
      %p54 = scmp.eq.s32.totalorder %s14, 0
      %p55 = por %p53, %p54
      %p56 = scmp.ne.s32.totalorder %s48, %s50
      %p57 = scmp.eq.s32.totalorder %s19, 1
      %p58 = por %p56, %p57
      %p59 = scmp.ne.s32.totalorder %s50, %s51
      %p60 = scmp.eq.s32.totalorder %s19, 0
      %p61 = por %p59, %p60
      %p62 = scmp.ne.s32.totalorder %s50, %s51
      %p63 = scmp.eq.s32.totalorder %s20, 1
      %p64 = por %p62, %p63
      %p66 = scmp.ne.s32.totalorder %s51, %s65
      %p67 = scmp.eq.s32.totalorder %s20, 0
      %p68 = por %p66, %p67
      %s70 = sadd.s32 %s69, 1
      %p73 = scmp.eq.s32.totalorder %s14, 1
      %p74 = scmp.ne.s32.totalorder %s69, %s71
      %p75 = scmp.eq.s32.totalorder %s14, 0
      %p76 = por %p74, %p75
      %p77 = scmp.ne.s32.totalorder %s69, %s71
      %p78 = scmp.eq.s32.totalorder %s19, 1
      %p79 = por %p77, %p78
      %p80 = scmp.ne.s32.totalorder %s71, %s72
      %p81 = scmp.eq.s32.totalorder %s19, 0
      %p82 = por %p80, %p81
      %p83 = scmp.ne.s32.totalorder %s71, %s72
      %p84 = scmp.eq.s32.totalorder %s20, 1
      %p85 = por %p83, %p84
      %p87 = scmp.ne.s32.totalorder %s72, %s86
      %p88 = scmp.eq.s32.totalorder %s20, 0
      %p89 = por %p87, %p88
      %s90 = ssub.s32 %s14, %s21
      %p91 = scmp.eq.s32.totalorder %s90, 0
      %s93 = sadd.s32 %s92, 1
      %s94 = scalar_select %p91, %s92, %s93
      %p97 = pneg %p91
      %p98 = scmp.eq.s32.totalorder %s14, 1
      %p99 = por %p97, %p98
      %p100 = scmp.ne.s32.totalorder %s92, %s95
      %p101 = scmp.eq.s32.totalorder %s14, 0
      %p102 = por %p100, %p101
      %p103 = scmp.ne.s32.totalorder %s92, %s95
      %p104 = scmp.eq.s32.totalorder %s19, 1
      %p105 = por %p103, %p104
      %p106 = scmp.ne.s32.totalorder %s95, %s96
      %p107 = scmp.eq.s32.totalorder %s19, 0
      %p108 = por %p106, %p107
      %p109 = scmp.ne.s32.totalorder %s95, %s96
      %p110 = scmp.eq.s32.totalorder %s20, 1
      %p111 = por %p109, %p110
      %p113 = scmp.ne.s32.totalorder %s96, %s112
      %p114 = scmp.eq.s32.totalorder %s20, 0
      %p115 = por %p113, %p114
      %s116 = ssub.s32 %s14, %s21
      %p117 = scmp.eq.s32.totalorder %s116, 0
      %s119 = sadd.s32 %s118, 1
      %s120 = scalar_select %p117, %s118, %s119
      %p123 = pneg %p117
      %p124 = scmp.eq.s32.totalorder %s14, 1
      %p125 = por %p123, %p124
      %p126 = scmp.ne.s32.totalorder %s118, %s121
      %p127 = scmp.eq.s32.totalorder %s14, 0
      %p128 = por %p126, %p127
      %p129 = scmp.ne.s32.totalorder %s118, %s121
      %p130 = scmp.eq.s32.totalorder %s19, 1
      %p131 = por %p129, %p130
      %p132 = scmp.ne.s32.totalorder %s121, %s122
      %p133 = scmp.eq.s32.totalorder %s19, 0
      %p134 = por %p132, %p133
      %p135 = scmp.ne.s32.totalorder %s121, %s122
      %p136 = scmp.eq.s32.totalorder %s20, 1
      %p137 = por %p135, %p136
      %p139 = scmp.ne.s32.totalorder %s122, %s138
      %p140 = scmp.eq.s32.totalorder %s20, 0
      %p141 = por %p139, %p140
      %p142 = scmp.le.s32.totalorder 1, %s14
      %p143 = scmp.lt.s32.totalorder %s14, 3
      %p144 = pnand %p142, %p143
      %p145 = pneg %p144
      // Predicated region
      $region9: #{conv_residual_bottleneck_forward.6} parent=5 // pred_check
        _
      $region10: #{conv_residual_bottleneck_forward.6} parent=5 // pred_check_branch
        %147 = sbr.rel (%p144) target = $region12
      $region11: #{conv_residual_bottleneck_forward.6} parent=5 // pred_region
        %s148 = ssub.s32 %s14, 1
        // Predicated region
        $region13: #{conv_residual_bottleneck_forward.6} parent=11 // pred_check
          %p149 = pneg %p61
        $region14: #{conv_residual_bottleneck_forward.6} parent=11 // pred_check_branch
          %151 = sbr.rel (%p149) target = $region16
        $region15: #{conv_residual_bottleneck_forward.6} parent=11 // pred_region
          _
        $region16: #{conv_residual_bottleneck_forward.6} parent=11 // pred_fallthru
          _
        // Predicated region
        $region17: #{conv_residual_bottleneck_forward.6} parent=11 // pred_check
          %p152 = pneg %p82
        $region18: #{conv_residual_bottleneck_forward.6} parent=11 // pred_check_branch
          %154 = sbr.rel (%p152) target = $region20
        $region19: #{conv_residual_bottleneck_forward.6} parent=11 // pred_region
          _
        $region20: #{conv_residual_bottleneck_forward.6} parent=11 // pred_fallthru
          _
      $region12: #{conv_residual_bottleneck_forward.6} parent=5 // pred_fallthru
        _
      %p155 = scmp.lt.s32.totalorder %s14, 2
      // Predicated region
      $region21: #{conv_residual_bottleneck_forward.6} parent=5 // pred_check
        %p156 = pneg %p155
      $region22: #{conv_residual_bottleneck_forward.6} parent=5 // pred_check_branch
        %158 = sbr.rel (%p156) target = $region24
      $region23: #{conv_residual_bottleneck_forward.6} parent=5 // pred_region
        // Predicated region
        $region25: #{conv_residual_bottleneck_forward.6} parent=23 // pred_check
          %p159 = pneg %p34
        $region26: #{conv_residual_bottleneck_forward.6} parent=23 // pred_check_branch
          %161 = sbr.rel (%p159) target = $region28
        $region27: #{conv_residual_bottleneck_forward.6} parent=23 // pred_region
          %s162 = smul.u32 2, %s14
          %p163 = scmp.lt.s32.totalorder %s162, 3
          %s164 = scalar_select %p163, %s162, 3
          %s165 = smul.addr %s164, 4
          %s166 = scalar_lea.vmem %s0, %s165
          %s167 = smul.u32 2, %s14
        $region28: #{conv_residual_bottleneck_forward.6} parent=23 // pred_fallthru
          _
      $region24: #{conv_residual_bottleneck_forward.6} parent=5 // pred_fallthru
        _
      %p168 = scmp.le.s32.totalorder 1, %s14
      %p169 = scmp.lt.s32.totalorder %s14, 3
      %p170 = pnand %p168, %p169
      %p171 = pneg %p170
      // Predicated region
      $region29: #{conv_residual_bottleneck_forward.6} parent=5 // pred_check
        _
      $region30: #{conv_residual_bottleneck_forward.6} parent=5 // pred_check_branch
        %173 = sbr.rel (%p170) target = $region32
      $region31: #{conv_residual_bottleneck_forward.6} parent=5 // pred_region
        %s174 = ssub.s32 %s14, 1
        %s175 = smul.u32 2, %s19
        %p176 = scmp.lt.s32.totalorder %s175, 3
        %s177 = scalar_select %p176, %s175, 3
        %s178 = smul.addr %s177, 4
        %s179 = scalar_lea.vmem %s0, %s178
        %p180 = pneg %p40
        %p181 = pneg %p37
        %p182 = pneg %p61
        %p183 = pneg %p58
        %p184 = pneg %p82
        %p185 = pneg %p79
        %p186 = pneg %p108
        %p187 = pneg %p105
        %s188 = smul.u32 2, %s19
        %p189 = scmp.lt.s32.totalorder %s188, 3
        %s190 = scalar_select %p189, %s188, 3
        %s191 = smul.addr %s190, 4
        %s192 = scalar_lea.vmem %s3, %s191
        %p193 = pneg %p134
        %p194 = pneg %p131
        %s195 = sand.u32 %s121, 1
        %s196 = scalar_lea.sflag [#allocation3], %s195
        %s197 = sand.u32 %s121, 1
        %s198 = smul.addr %s197, 8
        %s199 = scalar_lea.vmem [#allocation2], %s198
        %s200 = smul.u32 2, %s19
        %p201 = scmp.lt.s32.totalorder %s200, 3
        %s202 = scalar_select %p201, %s200, 3
        %s203 = smul.addr %s202, 4
        %s204 = scalar_lea.vmem %s0, %s203
        %s205 = smul.u32 2, %s19
        %s206 = smul.u32 2, %s19
        %p207 = scmp.lt.s32.totalorder %s206, 3
        %s208 = scalar_select %p207, %s206, 3
        %s209 = smul.addr %s208, 4
        %s210 = scalar_lea.vmem %s3, %s209
        %s211 = smul.u32 2, %s19
        %v213 = vld [vmem:[%s204] sm:$0xff]
        %v214 = vld [vmem:[%s2] sm:$0xff]
        %v215 = vld [vmem:[%s2 + $0x8] sm:$0x11]
        %v217 = vunpack.c.h.b16 %v213
        %v218 = vpack.c.b16 %v217, %v217
        %219 = vrot.lane.b32.xlu0 %v218, 17
        %v220 = vpop.permute.xlu0 %219
        %v221 = vunpack.c.l.b16 %v213
        %v222 = vpack.c.b16 %v221, %v221
        %223 = vrot.lane.b32.xlu0 %v222, 17
        %v224 = vpop.permute.xlu0 %223
        %vm225 = vcmask 138240
        %v226 = vsel %vm225, %v224, %v220
        %vm228 = vcmask 138240
        %v231 = vsel %vm228, %v220, %v224
        %v234 = vunpack.c.l.b16 %v214
        %v235 = vunpack.c.h.b16 %v214
        %v236 = vpack.c.b16 %v234, %v234
        %v237 = vpack.c.b16 %v235, %v235
        %v239 = vpack.i.b16 %v236, %v236
        %v241 = vlaneseq
        %v242 = vshrl.u32 %v241, 7
        %v243 = vsub.s32 0, %v242
        %v244 = vrot.slane %v239, %v243
        %v246 = vpack.i.b16 %v237, %v237
        %v248 = vlaneseq
        %v249 = vshrl.u32 %v248, 7
        %v250 = vsub.s32 0, %v249
        %v251 = vrot.slane %v246, %v250
        %v252 = vmul.bf16 %v231, %v244
        %v253 = vmul.bf16 %v226, %v251
        %254 = vrot.lane.b32.xlu0 %v218, 16
        %v255 = vpop.permute.xlu0 %254
        %256 = vrot.lane.b32.xlu0 %v222, 16
        %v257 = vpop.permute.xlu0 %256
        %vm258 = vcmask 130048
        %v259 = vsel %vm258, %v257, %v255
        %vm261 = vcmask 130048
        %v264 = vsel %vm261, %v255, %v257
        %v266 = vshrl.u32 %v236, 16
        %v267 = vpack.i.b16 %v266, %v266
        %v269 = vlaneseq
        %v270 = vshrl.u32 %v269, 7
        %v271 = vsub.s32 0, %v270
        %v272 = vrot.slane %v267, %v271
        %v273 = vshrl.u32 %v237, 16
        %v274 = vpack.i.b16 %v273, %v273
        %v276 = vlaneseq
        %v277 = vshrl.u32 %v276, 7
        %v278 = vsub.s32 0, %v277
        %v279 = vrot.slane %v274, %v278
        %v280 = vmul.bf16 %v264, %v272
        %v281 = vmul.bf16 %v259, %v279
        %282 = vrot.lane.b32.xlu0 %v218, 15
        %v283 = vpop.permute.xlu0 %282
        %284 = vrot.lane.b32.xlu0 %v222, 15
        %v285 = vpop.permute.xlu0 %284
        %vm286 = vcmask 121856
        %v287 = vsel %vm286, %v285, %v283
        %vm289 = vcmask 121856
        %v292 = vsel %vm289, %v283, %v285
        %v294 = vlaneseq
        %v295 = vshrl.u32 %v294, 7
        %v296 = vsub.s32 1, %v295
        %v297 = vrot.slane %v239, %v296
        %v298 = vlaneseq
        %v299 = vshrl.u32 %v298, 7
        %v300 = vsub.s32 1, %v299
        %v301 = vrot.slane %v246, %v300
        %v302 = vmul.bf16 %v292, %v297
        %v303 = vmul.bf16 %v287, %v301
        %304 = vrot.lane.b32.xlu0 %v218, 1
        %v305 = vpop.permute.xlu0 %304
        %306 = vrot.lane.b32.xlu0 %v222, 1
        %v307 = vpop.permute.xlu0 %306
        %vm308 = vcmask 7168
        %v309 = vsel %vm308, %v307, %v305
        %vm311 = vcmask 7168
        %v314 = vsel %vm311, %v305, %v307
        %v316 = vlaneseq
        %v317 = vshrl.u32 %v316, 7
        %v318 = vsub.s32 1, %v317
        %v319 = vrot.slane %v267, %v318
        %v320 = vlaneseq
        %v321 = vshrl.u32 %v320, 7
        %v322 = vsub.s32 1, %v321
        %v323 = vrot.slane %v274, %v322
        %v324 = vmul.bf16 %v314, %v319
        %v325 = vmul.bf16 %v309, %v323
        %v326 = vlaneseq
        %v327 = vshrl.u32 %v326, 7
        %v328 = vsub.s32 2, %v327
        %v329 = vrot.slane %v239, %v328
        %v330 = vlaneseq
        %v331 = vshrl.u32 %v330, 7
        %v332 = vsub.s32 2, %v331
        %v333 = vrot.slane %v246, %v332
        %v336 = vunpack.c.l.b16 %v329
        %v337 = vunpack.c.l.b16 %v333
        %v338 = vpack.c.b16 %v337, %v336
        %v340 = vmul.bf16 %v213, %v338
        %341 = vrot.lane.b32.xlu0 %v222, 127
        %v342 = vpop.permute.xlu0 %341
        %343 = vrot.lane.b32.xlu0 %v218, 127
        %v344 = vpop.permute.xlu0 %343
        %vm345 = vcmask 1039360
        %v346 = vsel %vm345, %v342, %v344
        %vm348 = vcmask 1039360
        %v351 = vsel %vm348, %v344, %v342
        %v353 = vlaneseq
        %v354 = vshrl.u32 %v353, 7
        %v355 = vsub.s32 2, %v354
        %v356 = vrot.slane %v267, %v355
        %v357 = vlaneseq
        %v358 = vshrl.u32 %v357, 7
        %v359 = vsub.s32 2, %v358
        %v360 = vrot.slane %v274, %v359
        %v361 = vmul.bf16 %v346, %v356
        %v362 = vmul.bf16 %v351, %v360
        %363 = vrot.lane.b32.xlu0 %v222, 113
        %v364 = vpop.permute.xlu0 %363
        %365 = vrot.lane.b32.xlu0 %v218, 113
        %v366 = vpop.permute.xlu0 %365
        %vm367 = vcmask 924672
        %v368 = vsel %vm367, %v364, %v366
        %vm370 = vcmask 924672
        %v373 = vsel %vm370, %v366, %v364
        %v375 = vlaneseq
        %v376 = vshrl.u32 %v375, 7
        %v377 = vsub.s32 3, %v376
        %v378 = vrot.slane %v239, %v377
        %v379 = vlaneseq
        %v380 = vshrl.u32 %v379, 7
        %v381 = vsub.s32 3, %v380
        %v382 = vrot.slane %v246, %v381
        %v383 = vmul.bf16 %v368, %v378
        %v384 = vmul.bf16 %v373, %v382
        %385 = vrot.lane.b32.xlu0 %v222, 112
        %v386 = vpop.permute.xlu0 %385
        %387 = vrot.lane.b32.xlu0 %v218, 112
        %v388 = vpop.permute.xlu0 %387
        %vm389 = vcmask 916480
        %v390 = vsel %vm389, %v386, %v388
        %vm392 = vcmask 916480
        %v395 = vsel %vm392, %v388, %v386
        %v397 = vlaneseq
        %v398 = vshrl.u32 %v397, 7
        %v399 = vsub.s32 3, %v398
        %v400 = vrot.slane %v267, %v399
        %v401 = vlaneseq
        %v402 = vshrl.u32 %v401, 7
        %v403 = vsub.s32 3, %v402
        %v404 = vrot.slane %v274, %v403
        %v405 = vmul.bf16 %v390, %v400
        %v406 = vmul.bf16 %v395, %v404
        %407 = vrot.lane.b32.xlu0 %v222, 111
        %v408 = vpop.permute.xlu0 %407
        %409 = vrot.lane.b32.xlu0 %v218, 111
        %v410 = vpop.permute.xlu0 %409
        %vm411 = vcmask 908288
        %v412 = vsel %vm411, %v408, %v410
        %vm414 = vcmask 908288
        %v417 = vsel %vm414, %v410, %v408
        %v420 = vunpack.c.l.b16 %v215
        %v421 = vunpack.c.h.b16 %v215
        %v422 = vpack.c.b16 %v420, %v420
        %v423 = vpack.c.b16 %v421, %v421
        %v425 = vpack.i.b16 %v422, %v422
        %v427 = vlaneseq
        %v428 = vshrl.u32 %v427, 7
        %v429 = vsub.s32 0, %v428
        %v430 = vrot.slane %v425, %v429
        %v432 = vpack.i.b16 %v423, %v423
        %v434 = vlaneseq
        %v435 = vshrl.u32 %v434, 7
        %v436 = vsub.s32 0, %v435
        %v437 = vrot.slane %v432, %v436
        %v438 = vmul.bf16 %v412, %v430
        %v439 = vmul.bf16 %v417, %v437
        %v442 = vrot.slane %v280, 4
        %v443 = vrot.slane %v281, 4
        %v446 = vrot.slane %v324, 4
        %v447 = vrot.slane %v325, 4
        %v449 = vunpack.c.l.b16 %v340
        %v450 = vunpack.c.h.b16 %v340
        %v451 = vpack.c.b16 %v449, %v449
        %v452 = vpack.c.b16 %v450, %v450
        %v455 = vrot.slane %v361, 4
        %v456 = vrot.slane %v362, 4
        %v459 = vrot.slane %v405, 4
        %v460 = vrot.slane %v406, 4
        %vm461 = vcmask 1043456
        %v464 = vsel %vm461, %v252, %v442
        %v468 = vsel %vm461, %v253, %v443
        %v472 = vsel %vm461, %v302, %v446
        %v476 = vsel %vm461, %v303, %v447
        %v480 = vsel %vm461, %v451, %v455
        %v484 = vsel %vm461, %v452, %v456
        %v488 = vsel %vm461, %v383, %v459
        %v492 = vsel %vm461, %v384, %v460
        %v495 = vsel %vm461, %v438, %v236
        %v498 = vsel %vm461, %v439, %v237
        %v500 = vld [vmem:[%s1] sm:$0xf]
        %vm501 = vcmask 662528
        %v503 = vsel %vm501, %v500, 0
        %vm505 = vcmask 1040384
        %v506 = vsel 0, 4294967295, 65535
        %v507 = vsel %vm505, %v506, 0
        %v508 = vand.u32 %v422, %v507
        %v510 = vand.u32 %v423, %v507
        %512 = vmatprep.subr.bf16.mxu0 0
        %513 = vmatpush1.bf16.msra.mxu0 0
        %514 = vmatprep.subr.bf16.mxu0 0
        %515 = vmatpush1.bf16.msra.mxu0 0
        %516 = vmatprep.subr.bf16.mxu0 %v510
        %517 = vmatpush1.bf16.msra.mxu0 %v508
        %518 = vmatprep.subr.bf16.mxu0 %v498
        %519 = vmatpush1.bf16.msra.mxu0 %v495
        %520 = vmatprep.subr.bf16.mxu0 %v492
        %521 = vmatpush1.bf16.msra.mxu0 %v488
        %522 = vmatprep.subr.bf16.mxu0 %v484
        %523 = vmatpush1.bf16.msra.mxu0 %v480
        %524 = vmatprep.subr.bf16.mxu0 %v476
        %525 = vmatpush1.bf16.msra.mxu0 %v472
        %526 = vmatprep.subr.bf16.mxu0 %v468
        %527 = vmatpush1.bf16.msra.mxu0 %v464
        %528 = vmatprep.subr.bf16.mxu0 0
        %529 = vmatpush2.bf16.msra.mxu0 0
        %530 = vmatprep.subr.bf16.mxu0 0
        %531 = vmatpush2.bf16.msra.mxu0 0
        %532 = vmatprep.subr.bf16.mxu0 0
        %533 = vmatpush2.bf16.msra.mxu0 0
        %534 = vmatprep.subr.bf16.mxu0 0
        %535 = vmatpush2.bf16.msra.mxu0 0
        %536 = vmatprep.subr.bf16.mxu0 0
        %537 = vmatpush2.bf16.msra.mxu0 0
        %538 = vmatprep.subr.bf16.mxu0 0
        %539 = vmatpush2.bf16.msra.mxu0 0
        %540 = vmatprep.subr.bf16.mxu0 0
        %541 = vmatpush2.bf16.msra.mxu0 0
        %542 = vmatprep.subr.bf16.mxu0 0
        %543 = vmatpush2.bf16.msra.mxu0 0
        %544 = vmatprep.mubr.bf16.mxu0 0
        %545 = vmatmul.mubr.bf16.gmra.mxu0 %v503
        %v546 = vpop.f32.mrf.mxu0
        %v547 = vadd.f32 0.0, %v546
        %v548 = vpop.f32.mrf.mxu0
        %v549 = vadd.f32 0.0, %v548
        %v550 = vpop.f32.mrf.mxu0
        %v551 = vpop.f32.mrf.mxu0
        %552 = vdwg.mxu0
        %v553 = vpack.c.bf16 %v547, %v547
        %v554 = vpack.c.bf16 %v549, %v549
        %v557 = vunpack.c.l.b16 %v553
        %v558 = vunpack.c.l.b16 %v554
        %v559 = vpack.c.b16 %v558, %v557
        %561 = vst [vmem:[%s210] sm:$0xff] %v559
        %v562 = vadd.f32 %v547, %v549
        %563 = vadd.xlane.f32.xlu0 %v562
        %v564 = vpop.xlane.xlu0 %563
        %v565 = vmul.f32 %v547, %v547
        %v566 = vmul.f32 %v549, %v549
        %v567 = vadd.f32 %v565, %v566
        %568 = vadd.xlane.f32.xlu0 %v567
        %v569 = vpop.xlane.xlu0 %568
        %v570 = vsel %vm311, %v564, %v569
        %vm571 = vcmask 15360
        %572 = vst.msk [vmem:[%s199] sm:$0xff] %vm571, %v570
        %s573 = smul.u32 2, %s19
        %p574 = scmp.lt.s32.totalorder %s573, 3
        %s575 = scalar_select %p574, %s573, 3
        %s576 = smul.addr %s575, 4
        %s577 = scalar_lea.vmem %s3, %s576
        %s578 = sand.u32 %s121, 1
        %s579 = scalar_lea.sflag [#allocation3], %s578
        %s580 = sand.u32 %s121, 1
        %s581 = smul.addr %s580, 8
        %s582 = scalar_lea.vmem [#allocation2], %s581
        // Predicated region
        $region33: #{conv_residual_bottleneck_forward.6} parent=31 // pred_check
          %p583 = pneg %p105
        $region34: #{conv_residual_bottleneck_forward.6} parent=31 // pred_check_branch
          %585 = sbr.rel (%p583) target = $region36
        $region35: #{conv_residual_bottleneck_forward.6} parent=31 // pred_region
          %s586 = smul.u32 2, %s19
        $region36: #{conv_residual_bottleneck_forward.6} parent=31 // pred_fallthru
          _
        // Predicated region
        $region37: #{conv_residual_bottleneck_forward.6} parent=31 // pred_check
          %p587 = pneg %p131
        $region38: #{conv_residual_bottleneck_forward.6} parent=31 // pred_check_branch
          %589 = sbr.rel (%p587) target = $region40
        $region39: #{conv_residual_bottleneck_forward.6} parent=31 // pred_region
          %s591 = ssub.s32 128, 128
          %592 = vsyncadd %s579, %s591
          %s593 = smul.addr %s19, 128
          %s594 = scalar_lea.hbm %s4, %s593
          %s596 = sshll.u32 %s582, 4
          %s597 = int_to_ptr.vmem [resolvable:$true] %s596
          %599 = dma.vmem_to_hbm [thread:$0]  %s597, 128, %s594, %s579
        $region40: #{conv_residual_bottleneck_forward.6} parent=31 // pred_fallthru
          _
      $region32: #{conv_residual_bottleneck_forward.6} parent=5 // pred_fallthru
        _
      %p600 = scmp.le.s32.totalorder 2, %s14
      // Predicated region
      $region41: #{conv_residual_bottleneck_forward.6} parent=5 // pred_check
        %p601 = pneg %p600
      $region42: #{conv_residual_bottleneck_forward.6} parent=5 // pred_check_branch
        %603 = sbr.rel (%p601) target = $region44
      $region43: #{conv_residual_bottleneck_forward.6} parent=5 // pred_region
        %s604 = ssub.s32 %s14, 2
        // Predicated region
        $region45: #{conv_residual_bottleneck_forward.6} parent=43 // pred_check
          %p605 = pneg %p111
        $region46: #{conv_residual_bottleneck_forward.6} parent=43 // pred_check_branch
          %607 = sbr.rel (%p605) target = $region48
        $region47: #{conv_residual_bottleneck_forward.6} parent=43 // pred_region
          %s608 = smul.u32 2, %s20
          %p609 = scmp.lt.s32.totalorder %s608, 3
          %s610 = scalar_select %p609, %s608, 3
          %s611 = smul.addr %s610, 4
          %s612 = scalar_lea.vmem %s3, %s611
        $region48: #{conv_residual_bottleneck_forward.6} parent=43 // pred_fallthru
          _
        // Predicated region
        $region49: #{conv_residual_bottleneck_forward.6} parent=43 // pred_check
          %p613 = pneg %p137
        $region50: #{conv_residual_bottleneck_forward.6} parent=43 // pred_check_branch
          %615 = sbr.rel (%p613) target = $region52
        $region51: #{conv_residual_bottleneck_forward.6} parent=43 // pred_region
          %s616 = sand.u32 %s122, 1
          %s617 = scalar_lea.sflag [#allocation3], %s616
          %s618 = sand.u32 %s122, 1
          %s619 = smul.addr %s618, 8
          %s620 = scalar_lea.vmem [#allocation2], %s619
          %621 = dma.done %s617, 128
        $region52: #{conv_residual_bottleneck_forward.6} parent=43 // pred_fallthru
          _
      $region44: #{conv_residual_bottleneck_forward.6} parent=5 // pred_fallthru
        _
    $region6: #{conv_residual_bottleneck_forward.6} parent=1 // loop_footer
      %s18 = sadd.s32 1, %s14
    $region7: #{conv_residual_bottleneck_forward.6} parent=1 // loop_footer_branch
      %13 = sbr.rel target = $region3
    $region8: #{conv_residual_bottleneck_forward.6} parent=1 // loop_exit
      _
    %622 = vsyncpa [#allocation3], 1
    %s623 = scalar_lea.sflag [#allocation3], 1
    %624 = vsyncpa %s623, 1

// kernel: conv_residual_bottleneck_forward.7
$region0: #{conv_residual_bottleneck_forward.7}
  #allocation0 [shape = 'u32[]', space=smem, size = 0x4, offset = 0x4, fixed_abs, tag = 'smem constant byte address 0x4 - core index']
  #allocation1 [shape = 'u32[144,128]{1,0:T(1,128)}', space=vmem, size = 0x12000, scoped, tag = 'internal scratch']
  %s0 = inlined_call_operand.vmem [shape: bf16[8,128], index: 0, kind: input, shape index: {}]
  %s1 = inlined_call_operand.vmem [shape: bf16[16,8], index: 1, kind: input, shape index: {}]
  %s2 = inlined_call_operand.vmem [shape: f32[16,1], index: 2, kind: input, shape index: {}]
  %s3 = inlined_call_operand.vmem [shape: bf16[16,128], index: 3, kind: output, shape index: {0}]
  %s4 = inlined_call_operand.vmem [shape: f32[1,16,2], index: 4, kind: output, shape index: {1}]
  %5 = xla_tuple %s3, %s4
  %s6 = sld [smem:[#allocation0]]
  $region30: #{conv_residual_bottleneck_forward.7} parent=0
    _
  %s8 = ssub.s32 1, %s6
  %s9 = scalar_select 0, %s8, %s6
  // Predicated region
  $region2: #{conv_residual_bottleneck_forward.7} parent=0 // pred_check
    _
  $region3: #{conv_residual_bottleneck_forward.7} parent=0 // pred_check_branch
    %11 = sbr.rel (0) target = $region5
  $region4: #{conv_residual_bottleneck_forward.7} parent=0 // pred_region
    _
  $region5: #{conv_residual_bottleneck_forward.7} parent=0 // pred_fallthru
    _
  // Predicated region
  $region6: #{conv_residual_bottleneck_forward.7} parent=0 // pred_check
    _
  $region7: #{conv_residual_bottleneck_forward.7} parent=0 // pred_check_branch
    %13 = sbr.rel (0) target = $region9
  $region8: #{conv_residual_bottleneck_forward.7} parent=0 // pred_region
    _
  $region9: #{conv_residual_bottleneck_forward.7} parent=0 // pred_fallthru
    _
  // Predicated region
  $region10: #{conv_residual_bottleneck_forward.7} parent=0 // pred_check
    _
  $region11: #{conv_residual_bottleneck_forward.7} parent=0 // pred_check_branch
    %15 = sbr.rel (0) target = $region13
  $region12: #{conv_residual_bottleneck_forward.7} parent=0 // pred_region
    _
  $region13: #{conv_residual_bottleneck_forward.7} parent=0 // pred_fallthru
    _
  %v17 = vld [vmem:[%s1] sm:$0xf]
  %v18 = vld [vmem:[%s1 + $0x4] sm:$0xf]
  %v19 = vld [vmem:[%s0] sm:$0xf]
  %v20 = vld [vmem:[%s2] sm:$0xff]
  %v21 = vld [vmem:[%s2 + $0x8] sm:$0xff]
  %23 = vset.pattern.permute.xlu0 0
  %24 = vperm.xlu0 %23, %v20
  %v25 = vpop.permute.xlu0 %24
  %28 = vset.pattern.permute.xlu0 0
  %29 = vperm.xlu0 %28, %v21
  %v30 = vpop.permute.xlu0 %29
  %v34 = vunpack.c.l.b16 %v17
  %v35 = vunpack.c.l.b16 %v18
  %v36 = vpack.c.b16 %v35, %v34
  %vm37 = vcmask 64512
  %v39 = vsel %vm37, %v36, 0
  %vm41 = vcmask 1043456
  %v43 = vsel %vm41, %v19, 0
  %45 = vmatprep.subr.bf16.mxu0 0
  %46 = vmatpush1.bf16.msra.mxu0 0
  %47 = vmatprep.subr.bf16.mxu0 0
  %48 = vmatpush1.bf16.msra.mxu0 0
  %49 = vmatprep.subr.bf16.mxu0 0
  %50 = vmatpush1.bf16.msra.mxu0 0
  %51 = vmatprep.subr.bf16.mxu0 0
  %52 = vmatpush1.bf16.msra.mxu0 0
  %53 = vmatprep.subr.bf16.mxu0 0
  %54 = vmatpush1.bf16.msra.mxu0 0
  %55 = vmatprep.subr.bf16.mxu0 0
  %56 = vmatpush1.bf16.msra.mxu0 0
  %57 = vmatprep.subr.bf16.mxu0 0
  %58 = vmatpush1.bf16.msra.mxu0 0
  %59 = vmatprep.subr.bf16.mxu0 0
  %60 = vmatpush1.bf16.msra.mxu0 %v43
  %61 = vmatprep.subr.bf16.mxu0 0
  %62 = vmatpush2.bf16.msra.mxu0 0
  %63 = vmatprep.subr.bf16.mxu0 0
  %64 = vmatpush2.bf16.msra.mxu0 0
  %65 = vmatprep.subr.bf16.mxu0 0
  %66 = vmatpush2.bf16.msra.mxu0 0
  %67 = vmatprep.subr.bf16.mxu0 0
  %68 = vmatpush2.bf16.msra.mxu0 0
  %69 = vmatprep.subr.bf16.mxu0 0
  %70 = vmatpush2.bf16.msra.mxu0 0
  %71 = vmatprep.subr.bf16.mxu0 0
  %72 = vmatpush2.bf16.msra.mxu0 0
  %73 = vmatprep.subr.bf16.mxu0 0
  %74 = vmatpush2.bf16.msra.mxu0 0
  %75 = vmatprep.subr.bf16.mxu0 0
  %76 = vmatpush2.bf16.msra.mxu0 0
  %77 = vmatprep.mubr.bf16.mxu0 0
  %78 = vmatmul.mubr.bf16.gmra.mxu0 %v39
  %v79 = vpop.f32.mrf.mxu0
  %v80 = vadd.f32 %v25, %v79
  %v81 = vpop.f32.mrf.mxu0
  %v82 = vpop.f32.mrf.mxu0
  %v83 = vadd.f32 %v30, %v82
  %v84 = vpop.f32.mrf.mxu0
  %85 = vdwg.mxu0
  %v86 = vpack.c.bf16 %v83, %v80
  %v88 = vunpack.c.l.b16 %v86
  %v89 = vunpack.c.h.b16 %v86
  %v90 = vpack.c.b16 %v88, %v88
  %v91 = vpack.c.b16 %v89, %v89
  %94 = vst [vmem:[%s3] sm:$0xf] %v90
  %95 = vst [vmem:[%s3 + $0x4] sm:$0xf] %v91
  %96 = vadd.xlane.f32.xlu0 %v80
  %v97 = vpop.xlane.xlu0 %96
  %98 = vadd.xlane.f32.xlu0 %v83
  %v99 = vpop.xlane.xlu0 %98
  %v100 = vmul.f32 %v80, %v80
  %v101 = vmul.f32 %v83, %v83
  %102 = vadd.xlane.f32.xlu0 %v100
  %v103 = vpop.xlane.xlu0 %102
  %104 = vadd.xlane.f32.xlu0 %v101
  %v105 = vpop.xlane.xlu0 %104
  %vm106 = vcmask 7168
  %v107 = vsel %vm106, %v97, %v103
  %v108 = vsel %vm106, %v99, %v105
  %vm109 = vcmask 15360
  %110 = vst.msk [vmem:[%s4] sm:$0xff] %vm109, %v107
  %111 = vst.msk [vmem:[%s4 + $0x8] sm:$0xff] %vm109, %v108
  // Predicated region
  $region14: #{conv_residual_bottleneck_forward.7} parent=0 // pred_check
    _
  $region15: #{conv_residual_bottleneck_forward.7} parent=0 // pred_check_branch
    %113 = sbr.rel (0) target = $region17
  $region16: #{conv_residual_bottleneck_forward.7} parent=0 // pred_region
    _
  $region17: #{conv_residual_bottleneck_forward.7} parent=0 // pred_fallthru
    _
  // Predicated region
  $region18: #{conv_residual_bottleneck_forward.7} parent=0 // pred_check
    _
  $region19: #{conv_residual_bottleneck_forward.7} parent=0 // pred_check_branch
    %115 = sbr.rel (0) target = $region21
  $region20: #{conv_residual_bottleneck_forward.7} parent=0 // pred_region
    _
  $region21: #{conv_residual_bottleneck_forward.7} parent=0 // pred_fallthru
    _
  // Predicated region
  $region22: #{conv_residual_bottleneck_forward.7} parent=0 // pred_check
    _
  $region23: #{conv_residual_bottleneck_forward.7} parent=0 // pred_check_branch
    %117 = sbr.rel (0) target = $region25
  $region24: #{conv_residual_bottleneck_forward.7} parent=0 // pred_region
    _
  $region25: #{conv_residual_bottleneck_forward.7} parent=0 // pred_fallthru
    _
  // Predicated region
  $region26: #{conv_residual_bottleneck_forward.7} parent=0 // pred_check
    _
  $region27: #{conv_residual_bottleneck_forward.7} parent=0 // pred_check_branch
    %119 = sbr.rel (0) target = $region29
  $region28: #{conv_residual_bottleneck_forward.7} parent=0 // pred_region
    _
  $region29: #{conv_residual_bottleneck_forward.7} parent=0 // pred_fallthru
    _

// kernel: conv_residual_bottleneck_forward.8
$region0: #{conv_residual_bottleneck_forward.8}
  #allocation0 [shape = 'u32[]', space=smem, size = 0x4, offset = 0x4, fixed_abs, tag = 'smem constant byte address 0x4 - core index']
  #allocation1 [shape = 'u32[144,128]{1,0:T(1,128)}', space=vmem, size = 0x12000, scoped, tag = 'internal scratch']
  %s0 = inlined_call_operand.vmem [shape: bf16[8,128], index: 0, kind: input, shape index: {}]
  %s1 = inlined_call_operand.vmem [shape: bf16[16,8], index: 1, kind: input, shape index: {}]
  %s2 = inlined_call_operand.vmem [shape: bf16[16,128], index: 2, kind: output, shape index: {0}]
  %s3 = inlined_call_operand.vmem [shape: f32[1,16,2], index: 3, kind: output, shape index: {1}]
  %4 = xla_tuple %s2, %s3
  %s5 = sld [smem:[#allocation0]]
  $region26: #{conv_residual_bottleneck_forward.8} parent=0
    _
  %s7 = ssub.s32 1, %s5
  %s8 = scalar_select 0, %s7, %s5
  // Predicated region
  $region2: #{conv_residual_bottleneck_forward.8} parent=0 // pred_check
    _
  $region3: #{conv_residual_bottleneck_forward.8} parent=0 // pred_check_branch
    %10 = sbr.rel (0) target = $region5
  $region4: #{conv_residual_bottleneck_forward.8} parent=0 // pred_region
    _
  $region5: #{conv_residual_bottleneck_forward.8} parent=0 // pred_fallthru
    _
  // Predicated region
  $region6: #{conv_residual_bottleneck_forward.8} parent=0 // pred_check
    _
  $region7: #{conv_residual_bottleneck_forward.8} parent=0 // pred_check_branch
    %12 = sbr.rel (0) target = $region9
  $region8: #{conv_residual_bottleneck_forward.8} parent=0 // pred_region
    _
  $region9: #{conv_residual_bottleneck_forward.8} parent=0 // pred_fallthru
    _
  %v14 = vld [vmem:[%s1] sm:$0xf]
  %v15 = vld [vmem:[%s1 + $0x4] sm:$0xf]
  %v16 = vld [vmem:[%s0] sm:$0xf]
  %v19 = vunpack.c.l.b16 %v14
  %v20 = vunpack.c.l.b16 %v15
  %v21 = vpack.c.b16 %v20, %v19
  %vm22 = vcmask 64512
  %v24 = vsel %vm22, %v21, 0
  %vm26 = vcmask 1043456
  %v28 = vsel %vm26, %v16, 0
  %30 = vmatprep.subr.bf16.mxu0 0
  %31 = vmatpush1.bf16.msra.mxu0 0
  %32 = vmatprep.subr.bf16.mxu0 0
  %33 = vmatpush1.bf16.msra.mxu0 0
  %34 = vmatprep.subr.bf16.mxu0 0
  %35 = vmatpush1.bf16.msra.mxu0 0
  %36 = vmatprep.subr.bf16.mxu0 0
  %37 = vmatpush1.bf16.msra.mxu0 0
  %38 = vmatprep.subr.bf16.mxu0 0
  %39 = vmatpush1.bf16.msra.mxu0 0
  %40 = vmatprep.subr.bf16.mxu0 0
  %41 = vmatpush1.bf16.msra.mxu0 0
  %42 = vmatprep.subr.bf16.mxu0 0
  %43 = vmatpush1.bf16.msra.mxu0 0
  %44 = vmatprep.subr.bf16.mxu0 0
  %45 = vmatpush1.bf16.msra.mxu0 %v28
  %46 = vmatprep.subr.bf16.mxu0 0
  %47 = vmatpush2.bf16.msra.mxu0 0
  %48 = vmatprep.subr.bf16.mxu0 0
  %49 = vmatpush2.bf16.msra.mxu0 0
  %50 = vmatprep.subr.bf16.mxu0 0
  %51 = vmatpush2.bf16.msra.mxu0 0
  %52 = vmatprep.subr.bf16.mxu0 0
  %53 = vmatpush2.bf16.msra.mxu0 0
  %54 = vmatprep.subr.bf16.mxu0 0
  %55 = vmatpush2.bf16.msra.mxu0 0
  %56 = vmatprep.subr.bf16.mxu0 0
  %57 = vmatpush2.bf16.msra.mxu0 0
  %58 = vmatprep.subr.bf16.mxu0 0
  %59 = vmatpush2.bf16.msra.mxu0 0
  %60 = vmatprep.subr.bf16.mxu0 0
  %61 = vmatpush2.bf16.msra.mxu0 0
  %62 = vmatprep.mubr.bf16.mxu0 0
  %63 = vmatmul.mubr.bf16.gmra.mxu0 %v24
  %v64 = vpop.f32.mrf.mxu0
  %v65 = vadd.f32 0.0, %v64
  %v66 = vpop.f32.mrf.mxu0
  %v67 = vpop.f32.mrf.mxu0
  %v68 = vadd.f32 0.0, %v67
  %v69 = vpop.f32.mrf.mxu0
  %70 = vdwg.mxu0
  %v71 = vpack.c.bf16 %v68, %v65
  %v73 = vunpack.c.l.b16 %v71
  %v74 = vunpack.c.h.b16 %v71
  %v75 = vpack.c.b16 %v73, %v73
  %v76 = vpack.c.b16 %v74, %v74
  %79 = vst [vmem:[%s2] sm:$0xf] %v75
  %80 = vst [vmem:[%s2 + $0x4] sm:$0xf] %v76
  %81 = vadd.xlane.f32.xlu0 %v65
  %v82 = vpop.xlane.xlu0 %81
  %83 = vadd.xlane.f32.xlu0 %v68
  %v84 = vpop.xlane.xlu0 %83
  %v85 = vmul.f32 %v65, %v65
  %v86 = vmul.f32 %v68, %v68
  %87 = vadd.xlane.f32.xlu0 %v85
  %v88 = vpop.xlane.xlu0 %87
  %89 = vadd.xlane.f32.xlu0 %v86
  %v90 = vpop.xlane.xlu0 %89
  %vm91 = vcmask 7168
  %v92 = vsel %vm91, %v82, %v88
  %v93 = vsel %vm91, %v84, %v90
  %vm94 = vcmask 15360
  %95 = vst.msk [vmem:[%s3] sm:$0xff] %vm94, %v92
  %96 = vst.msk [vmem:[%s3 + $0x8] sm:$0xff] %vm94, %v93
  // Predicated region
  $region10: #{conv_residual_bottleneck_forward.8} parent=0 // pred_check
    _
  $region11: #{conv_residual_bottleneck_forward.8} parent=0 // pred_check_branch
    %98 = sbr.rel (0) target = $region13
  $region12: #{conv_residual_bottleneck_forward.8} parent=0 // pred_region
    _
  $region13: #{conv_residual_bottleneck_forward.8} parent=0 // pred_fallthru
    _
  // Predicated region
  $region14: #{conv_residual_bottleneck_forward.8} parent=0 // pred_check
    _
  $region15: #{conv_residual_bottleneck_forward.8} parent=0 // pred_check_branch
    %100 = sbr.rel (0) target = $region17
  $region16: #{conv_residual_bottleneck_forward.8} parent=0 // pred_region
    _
  $region17: #{conv_residual_bottleneck_forward.8} parent=0 // pred_fallthru
    _
  // Predicated region
  $region18: #{conv_residual_bottleneck_forward.8} parent=0 // pred_check
    _
  $region19: #{conv_residual_bottleneck_forward.8} parent=0 // pred_check_branch
    %102 = sbr.rel (0) target = $region21
  $region20: #{conv_residual_bottleneck_forward.8} parent=0 // pred_region
    _
  $region21: #{conv_residual_bottleneck_forward.8} parent=0 // pred_fallthru
    _
  // Predicated region
  $region22: #{conv_residual_bottleneck_forward.8} parent=0 // pred_check
    _
  $region23: #{conv_residual_bottleneck_forward.8} parent=0 // pred_check_branch
    %104 = sbr.rel (0) target = $region25
  $region24: #{conv_residual_bottleneck_forward.8} parent=0 // pred_region
    _
  $region25: #{conv_residual_bottleneck_forward.8} parent=0 // pred_fallthru
    _

// kernel: conv_residual_bottleneck_forward.9
$region0: #{conv_residual_bottleneck_forward.9}
  #allocation0 [shape = 'u32[]', space=smem, size = 0x4, offset = 0x4, fixed_abs, tag = 'smem constant byte address 0x4 - core index']
  #allocation1 [shape = 'u32[144,128]{1,0:T(1,128)}', space=vmem, size = 0x12000, scoped, tag = 'internal scratch']
  %s0 = inlined_call_operand.vmem [shape: bf16[16,128], index: 0, kind: input, shape index: {}]
  %s1 = inlined_call_operand.vmem [shape: bf16[16,128], index: 1, kind: input, shape index: {}]
  %s2 = inlined_call_operand.vmem [shape: f32[16,1], index: 2, kind: input, shape index: {}]
  %s3 = inlined_call_operand.vmem [shape: f32[16,1], index: 3, kind: input, shape index: {}]
  %s4 = inlined_call_operand.vmem [shape: f32[16,1], index: 4, kind: input, shape index: {}]
  %s5 = inlined_call_operand.vmem [shape: f32[16,1], index: 5, kind: input, shape index: {}]
  %s6 = inlined_call_operand.vmem [shape: f32[16,128], index: 6, kind: output, shape index: {}]
  %s7 = sld [smem:[#allocation0]]
  $region34: #{conv_residual_bottleneck_forward.9} parent=0
    _
  %s9 = ssub.s32 1, %s7
  %s10 = scalar_select 0, %s9, %s7
  // Predicated region
  $region2: #{conv_residual_bottleneck_forward.9} parent=0 // pred_check
    _
  $region3: #{conv_residual_bottleneck_forward.9} parent=0 // pred_check_branch
    %12 = sbr.rel (0) target = $region5
  $region4: #{conv_residual_bottleneck_forward.9} parent=0 // pred_region
    _
  $region5: #{conv_residual_bottleneck_forward.9} parent=0 // pred_fallthru
    _
  // Predicated region
  $region6: #{conv_residual_bottleneck_forward.9} parent=0 // pred_check
    _
  $region7: #{conv_residual_bottleneck_forward.9} parent=0 // pred_check_branch
    %14 = sbr.rel (0) target = $region9
  $region8: #{conv_residual_bottleneck_forward.9} parent=0 // pred_region
    _
  $region9: #{conv_residual_bottleneck_forward.9} parent=0 // pred_fallthru
    _
  // Predicated region
  $region10: #{conv_residual_bottleneck_forward.9} parent=0 // pred_check
    _
  $region11: #{conv_residual_bottleneck_forward.9} parent=0 // pred_check_branch
    %16 = sbr.rel (0) target = $region13
  $region12: #{conv_residual_bottleneck_forward.9} parent=0 // pred_region
    _
  $region13: #{conv_residual_bottleneck_forward.9} parent=0 // pred_fallthru
    _
  // Predicated region
  $region14: #{conv_residual_bottleneck_forward.9} parent=0 // pred_check
    _
  $region15: #{conv_residual_bottleneck_forward.9} parent=0 // pred_check_branch
    %18 = sbr.rel (0) target = $region17
  $region16: #{conv_residual_bottleneck_forward.9} parent=0 // pred_region
    _
  $region17: #{conv_residual_bottleneck_forward.9} parent=0 // pred_fallthru
    _
  // Predicated region
  $region18: #{conv_residual_bottleneck_forward.9} parent=0 // pred_check
    _
  $region19: #{conv_residual_bottleneck_forward.9} parent=0 // pred_check_branch
    %20 = sbr.rel (0) target = $region21
  $region20: #{conv_residual_bottleneck_forward.9} parent=0 // pred_region
    _
  $region21: #{conv_residual_bottleneck_forward.9} parent=0 // pred_fallthru
    _
  // Predicated region
  $region22: #{conv_residual_bottleneck_forward.9} parent=0 // pred_check
    _
  $region23: #{conv_residual_bottleneck_forward.9} parent=0 // pred_check_branch
    %22 = sbr.rel (0) target = $region25
  $region24: #{conv_residual_bottleneck_forward.9} parent=0 // pred_region
    _
  $region25: #{conv_residual_bottleneck_forward.9} parent=0 // pred_fallthru
    _
  %v23 = vld [vmem:[%s0] sm:$0xf]
  %v24 = vld [vmem:[%s0 + $0x4] sm:$0xf]
  %v25 = vunpack.c.l.bf16 %v23
  %v26 = vunpack.c.l.bf16 %v24
  %v27 = vld [vmem:[%s2] sm:$0xff]
  %v28 = vld [vmem:[%s2 + $0x8] sm:$0xff]
  %30 = vset.pattern.permute.xlu0 0
  %31 = vperm.xlu0 %30, %v27
  %v32 = vpop.permute.xlu0 %31
  %35 = vset.pattern.permute.xlu0 0
  %36 = vperm.xlu0 %35, %v28
  %v37 = vpop.permute.xlu0 %36
  %v39 = vmul.f32 %v25, %v32
  %v40 = vmul.f32 %v26, %v37
  %v41 = vld [vmem:[%s3] sm:$0xff]
  %v42 = vld [vmem:[%s3 + $0x8] sm:$0xff]
  %44 = vset.pattern.permute.xlu0 0
  %45 = vperm.xlu0 %44, %v41
  %v46 = vpop.permute.xlu0 %45
  %49 = vset.pattern.permute.xlu0 0
  %50 = vperm.xlu0 %49, %v42
  %v51 = vpop.permute.xlu0 %50
  %v53 = vadd.f32 %v39, %v46
  %v54 = vadd.f32 %v40, %v51
  %v55 = vmax.f32 %v53, 0.0
  %v56 = vmax.f32 %v54, 0.0
  %v57 = vld [vmem:[%s1] sm:$0xf]
  %v58 = vld [vmem:[%s1 + $0x4] sm:$0xf]
  %v59 = vunpack.c.l.bf16 %v57
  %v60 = vunpack.c.l.bf16 %v58
  %v61 = vld [vmem:[%s4] sm:$0xff]
  %v62 = vld [vmem:[%s4 + $0x8] sm:$0xff]
  %64 = vset.pattern.permute.xlu0 0
  %65 = vperm.xlu0 %64, %v61
  %v66 = vpop.permute.xlu0 %65
  %69 = vset.pattern.permute.xlu0 0
  %70 = vperm.xlu0 %69, %v62
  %v71 = vpop.permute.xlu0 %70
  %v73 = vmul.f32 %v59, %v66
  %v74 = vmul.f32 %v60, %v71
  %v75 = vld [vmem:[%s5] sm:$0xff]
  %v76 = vld [vmem:[%s5 + $0x8] sm:$0xff]
  %78 = vset.pattern.permute.xlu0 0
  %79 = vperm.xlu0 %78, %v75
  %v80 = vpop.permute.xlu0 %79
  %83 = vset.pattern.permute.xlu0 0
  %84 = vperm.xlu0 %83, %v76
  %v85 = vpop.permute.xlu0 %84
  %v87 = vadd.f32 %v73, %v80
  %v88 = vadd.f32 %v74, %v85
  %v89 = vadd.f32 %v55, %v87
  %v90 = vadd.f32 %v56, %v88
  %91 = vst [vmem:[%s6] sm:$0xff] %v89
  %92 = vst [vmem:[%s6 + $0x8] sm:$0xff] %v90
  // Predicated region
  $region26: #{conv_residual_bottleneck_forward.9} parent=0 // pred_check
    _
  $region27: #{conv_residual_bottleneck_forward.9} parent=0 // pred_check_branch
    %94 = sbr.rel (0) target = $region29
  $region28: #{conv_residual_bottleneck_forward.9} parent=0 // pred_region
    _
  $region29: #{conv_residual_bottleneck_forward.9} parent=0 // pred_fallthru
    _
  // Predicated region
  $region30: #{conv_residual_bottleneck_forward.9} parent=0 // pred_check
    _
  $region31: #{conv_residual_bottleneck_forward.9} parent=0 // pred_check_branch
    %96 = sbr.rel (0) target = $region33
  $region32: #{conv_residual_bottleneck_forward.9} parent=0 // pred_region
    _
  $region33: #{conv_residual_bottleneck_forward.9} parent=0 // pred_fallthru
    _

</llo_original>
